<compile_context>
chip_gen: v5e
topology: v5e:2x2
jax: 0.10.0
libtpu: 0.0.40
codegen_flags: <defaults>
</compile_context>

<pallas_src>
import jax
import jax.numpy as jnp
from jax.experimental import pallas as pl
from jax.experimental.pallas import tpu as pltpu


def _round_up(x, m):
    return ((x + m - 1) // m) * m


def _trunk(z_ref, w1, b1, w2, b2, w3, b3, w4, b4):
    """Layers 1-4 (Linear + ReLU x4). bf16 MXU operands, f32 accumulation."""
    h = z_ref[...].astype(jnp.bfloat16)
    for w_ref, b_ref in ((w1, b1), (w2, b2), (w3, b3), (w4, b4)):
        h = jnp.dot(h, w_ref[...], preferred_element_type=jnp.float32) + b_ref[...]
        h = jnp.maximum(h, 0.0).astype(jnp.bfloat16)
    return h


def _fused_kernel(z_ref, w1, b1, w2, b2, w3, b3, w4, b4, w5_ref, b5_ref, out_ref):
    """Whole-W5 path (out_dim <= n_tile): grid = (batch tiles,), no scratch."""
    h = _trunk(z_ref, w1, b1, w2, b2, w3, b3, w4, b4)
    out = jnp.dot(h, w5_ref[...], preferred_element_type=jnp.float32) + b5_ref[...]
    out_ref[...] = out.astype(out_ref.dtype)


def _streamed_kernel(z_ref, w1, b1, w2, b2, w3, b3, w4, b4, w5_ref, b5_ref,
                     out_ref, h4_ref):
    """Streamed-W5 path: grid = (N-slab outer, batch-tile inner).

    W5's block index depends only on j, so each (1024, tn) slab is DMA'd once.
    Layers 1-4 are computed once per batch tile (first N slab) and cached in
    the per-tile bf16 scratch h4_ref[i].
    """
    j = pl.program_id(0)   # W5 column-slab axis (outer, "arbitrary")
    i = pl.program_id(1)   # batch-tile axis (inner, "parallel")

    @pl.when(j == 0)
    def _():
        h4_ref[i] = _trunk(z_ref, w1, b1, w2, b2, w3, b3, w4, b4)

    out = jnp.dot(h4_ref[i], w5_ref[...], preferred_element_type=jnp.float32)
    out_ref[...] = (out + b5_ref[...]).astype(out_ref.dtype)


def prepare_generator_params(params):
    """Cast parameters ONCE: weights -> bf16, biases -> f32 row vectors (1, out).

    Call this once and reuse the result across forward calls so the f32->bf16
    weight cast is not re-executed (and HBM re-read) on every call.
    """
    prepped = []
    for w, b in params:
        prepped.append((jnp.asarray(w, jnp.bfloat16),
                        jnp.asarray(b, jnp.float32).reshape(1, -1)))
    return prepped


def generator_forward(z, params, num_points, *, batch_tile=512, n_tile=2048,
                      vmem_limit_bytes=48 << 20):
    """z: (..., z_size). params: list of (W, b); W is (in, out).

    Pass params through `prepare_generator_params` once for best performance
    (raw f32 params also work; they are then cast per call).
    """
    z_size = params[0][0].shape[0]
    # torch: input.squeeze(), then treated as a (B, z_size) matrix.
    z2d = jnp.squeeze(z).reshape(-1, z_size).astype(jnp.float32)
    B = z2d.shape[0]
    out_dim = num_points * 3
    dims = (z_size, 64, 128, 512, 1024, out_dim)

    # Flatten params; only cast if the caller skipped prepare_generator_params.
    flat_args = [z2d]
    for w, b in params:
        if w.dtype != jnp.bfloat16:
            w = w.astype(jnp.bfloat16)
        if b.ndim != 2:
            b = jnp.reshape(b, (1, -1))
        if b.dtype != jnp.float32:
            b = b.astype(jnp.float32)
        flat_args += [w, b]

    # Batch tiling: one tile for tiny B; otherwise >= 2 tiles of 16-aligned
    # rows (keeps both TensorCores busy on v7x), capped by batch_tile.
    if B <= 16:
        tb = B
    else:
        tb = max(16, min(_round_up(batch_tile, 16),
                         _round_up(pl.cdiv(B, 2), 16)))
    nb = pl.cdiv(B, tb)

    # Last-layer column tiling (lane-dense W5 slabs, multiples of 128).
    if out_dim <= n_tile:
        tn = out_dim
    else:
        tn = _round_up(n_tile, 128)
    nn = pl.cdiv(out_dim, tn)

    w_shapes = [(dims[k], dims[k + 1]) for k in range(4)]

    if nn == 1:
        # W5 stays whole & VMEM-resident; no scratch, no h4 store/reload.
        grid = (nb,)
        in_specs = [pl.BlockSpec((tb, z_size), lambda i: (i, 0))]
        for (din, dout) in w_shapes:
            in_specs += [pl.BlockSpec((din, dout), lambda i: (0, 0)),
                         pl.BlockSpec((1, dout), lambda i: (0, 0))]
        in_specs += [pl.BlockSpec((1024, out_dim), lambda i: (0, 0)),
                     pl.BlockSpec((1, out_dim), lambda i: (0, 0))]
        out_spec = pl.BlockSpec((tb, out_dim), lambda i: (i, 0))
        kernel = _fused_kernel
        scratch = ()
        semantics = ("parallel",)
    else:
        # N-slab outer / batch-tile inner: W5 streamed exactly once.
        grid = (nn, nb)
        in_specs = [pl.BlockSpec((tb, z_size), lambda j, i: (i, 0))]
        for (din, dout) in w_shapes:
            in_specs += [pl.BlockSpec((din, dout), lambda j, i: (0, 0)),
                         pl.BlockSpec((1, dout), lambda j, i: (0, 0))]
        in_specs += [pl.BlockSpec((1024, tn), lambda j, i: (0, j)),
                     pl.BlockSpec((1, tn), lambda j, i: (0, j))]
        out_spec = pl.BlockSpec((tb, tn), lambda j, i: (i, j))
        kernel = _streamed_kernel
        scratch = [pltpu.VMEM((nb, tb, 1024), jnp.bfloat16)]
        semantics = ("arbitrary", "parallel")

    flops = 2 * B * sum(dims[k] * dims[k + 1] for k in range(5))
    weight_bytes = sum(int(a.size) * a.dtype.itemsize for a in flat_args[1:])
    bytes_accessed = (nn * int(z2d.size) * 4          # z re-read per N slab
                      + B * out_dim * 4               # f32 output writeback
                      + weight_bytes)                 # each weight streamed once

    out = pl.pallas_call(
        kernel,
        out_shape=jax.ShapeDtypeStruct((B, out_dim), jnp.float32),
        grid_spec=pltpu.PrefetchScalarGridSpec(
            num_scalar_prefetch=0,
            grid=grid,
            in_specs=in_specs,
            out_specs=out_spec,
            scratch_shapes=scratch,
        ),
        compiler_params=pltpu.CompilerParams(
            dimension_semantics=semantics,
            vmem_limit_bytes=vmem_limit_bytes,
        ),
        cost_estimate=pl.CostEstimate(flops=flops, transcendentals=0,
                                      bytes_accessed=bytes_accessed),
    )(*flat_args)

    # torch: output.view(-1, 3, num_points)  (row-major reshape)
    return out.reshape(-1, 3, num_points)


def init_generator_params(key, z_size, num_points, use_bias=True):
    """Deterministic PyTorch-style init: U(-1/sqrt(fan_in), 1/sqrt(fan_in))."""
    dims = [z_size, 64, 128, 512, 1024, num_points * 3]
    params = []
    for i in range(len(dims) - 1):
        fan_in, fan_out = dims[i], dims[i + 1]
        key, kw, kb = jax.random.split(key, 3)
        bound = 1.0 / jnp.sqrt(jnp.float32(fan_in))
        w = jax.random.uniform(kw, (fan_in, fan_out), jnp.float32, -bound, bound)
        if use_bias:
            b = jax.random.uniform(kb, (1, fan_out), jnp.float32, -bound, bound)
        else:
            b = jnp.zeros((1, fan_out), jnp.float32)
        params.append((w, b))
    return params


def _ref_forward(z, params, num_points):
    """Plain-JAX reference with the same bf16-operand / f32-accum math."""
    z_size = params[0][0].shape[0]
    h = jnp.squeeze(z).reshape(-1, z_size).astype(jnp.float32)
    for i, (w, b) in enumerate(params):
        h = jnp.dot(h.astype(jnp.bfloat16), w.astype(jnp.bfloat16),
                    preferred_element_type=jnp.float32) + b.reshape(1, -1).astype(jnp.float32)
        if i < len(params) - 1:
            h = jnp.maximum(h, 0.0)
    return h.reshape(-1, 3, num_points)


if __name__ == "__main__":
    key = jax.random.PRNGKey(0)

    # --- Test 1: tiny config -> fused path (single grid step) ---------------
    z_size, num_points, batch = 32, 64, 2          # out_dim = 192 <= n_tile
    key, kz = jax.random.split(key)
    z = jax.random.normal(kz, (batch, z_size), jnp.float32)
    params = init_generator_params(jax.random.PRNGKey(0), z_size, num_points)
    pparams = prepare_generator_params(params)     # bf16 cast happens ONCE here

    out = jax.block_until_ready(generator_forward(z, pparams, num_points))
    assert out.shape == (batch, 3, num_points), out.shape
    assert out.dtype == jnp.float32
    ref = _ref_forward(z, params, num_points)
    assert jnp.allclose(out, ref, atol=1e-2, rtol=1e-2)

    # --- Test 2: streamed path, multiple batch tiles (incl. a partial one) --
    z_size2, num_points2, batch2 = 32, 128, 40     # out_dim = 384, 3 N slabs
    key, kz2 = jax.random.split(key)
    z2 = jax.random.normal(kz2, (batch2, z_size2), jnp.float32)
    params2 = init_generator_params(jax.random.PRNGKey(1), z_size2, num_points2)
    pparams2 = prepare_generator_params(params2)

    out2 = jax.block_until_ready(
        generator_forward(z2, pparams2, num_points2, batch_tile=16, n_tile=128))
    assert out2.shape == (batch2, 3, num_points2), out2.shape
    ref2 = _ref_forward(z2, params2, num_points2)
    assert jnp.allclose(out2, ref2, atol=1e-2, rtol=1e-2)

    # --- Test 3: default tiles, large out_dim -> streamed path w/ defaults --
    z_size3, num_points3, batch3 = 32, 2048, 20    # out_dim = 6144, nn = 3
    key, kz3 = jax.random.split(key)
    z3 = jax.random.normal(kz3, (batch3, z_size3), jnp.float32)
    params3 = init_generator_params(jax.random.PRNGKey(2), z_size3, num_points3)
    pparams3 = prepare_generator_params(params3)

    out3 = jax.block_until_ready(generator_forward(z3, pparams3, num_points3))
    assert out3.shape == (batch3, 3, num_points3), out3.shape
    ref3 = _ref_forward(z3, params3, num_points3)
    assert jnp.allclose(out3, ref3, atol=1e-2, rtol=1e-2)

    print("KERNEL_OK")
</pallas_src>

<mosaic_0001>
module attributes {stable_mosaic.version = 11 : i64} {
  func.func @_fused_kernel(%arg0: i32, %arg1: memref<2x32xf32, #tpu.memory_space<vmem>>, %arg2: memref<32x64xbf16, #tpu.memory_space<vmem>>, %arg3: memref<1x64xf32, #tpu.memory_space<vmem>>, %arg4: memref<64x128xbf16, #tpu.memory_space<vmem>>, %arg5: memref<1x128xf32, #tpu.memory_space<vmem>>, %arg6: memref<128x512xbf16, #tpu.memory_space<vmem>>, %arg7: memref<1x512xf32, #tpu.memory_space<vmem>>, %arg8: memref<512x1024xbf16, #tpu.memory_space<vmem>>, %arg9: memref<1x1024xf32, #tpu.memory_space<vmem>>, %arg10: memref<1024x192xbf16, #tpu.memory_space<vmem>>, %arg11: memref<1x192xf32, #tpu.memory_space<vmem>>, %arg12: memref<2x192xf32, #tpu.memory_space<vmem>>) attributes {dimension_semantics = [#tpu.dimension_semantics<parallel>], iteration_bounds = array<i64: 1>, scalar_prefetch = 0 : i64, scratch_operands = 0 : i64, tpu.core_type = #tpu.core_type<tc>, window_params = [{transform_indices = @transform_0, window_bounds = array<i64: 2, 32>}, {pipeline_mode = #tpu.pipeline_mode<synchronous>, transform_indices = @transform_1, window_bounds = array<i64: 32, 64>}, {pipeline_mode = #tpu.pipeline_mode<synchronous>, transform_indices = @transform_2, window_bounds = array<i64: 1, 64>}, {pipeline_mode = #tpu.pipeline_mode<synchronous>, transform_indices = @transform_3, window_bounds = array<i64: 64, 128>}, {pipeline_mode = #tpu.pipeline_mode<synchronous>, transform_indices = @transform_4, window_bounds = array<i64: 1, 128>}, {pipeline_mode = #tpu.pipeline_mode<synchronous>, transform_indices = @transform_5, window_bounds = array<i64: 128, 512>}, {pipeline_mode = #tpu.pipeline_mode<synchronous>, transform_indices = @transform_6, window_bounds = array<i64: 1, 512>}, {pipeline_mode = #tpu.pipeline_mode<synchronous>, transform_indices = @transform_7, window_bounds = array<i64: 512, 1024>}, {pipeline_mode = #tpu.pipeline_mode<synchronous>, transform_indices = @transform_8, window_bounds = array<i64: 1, 1024>}, {pipeline_mode = #tpu.pipeline_mode<synchronous>, transform_indices = @transform_9, window_bounds = array<i64: 1024, 192>}, {pipeline_mode = #tpu.pipeline_mode<synchronous>, transform_indices = @transform_10, window_bounds = array<i64: 1, 192>}, {transform_indices = @transform_11, window_bounds = array<i64: 2, 192>}]} {
    %c0 = arith.constant 0 : index
    %c0_0 = arith.constant 0 : index
    %0 = vector.load %arg1[%c0, %c0_0] : memref<2x32xf32, #tpu.memory_space<vmem>>, vector<2x32xf32>
    %1 = arith.truncf %0 : vector<2x32xf32> to vector<2x32xbf16>
    %c0_1 = arith.constant 0 : index
    %c0_2 = arith.constant 0 : index
    %2 = vector.load %arg2[%c0_1, %c0_2] : memref<32x64xbf16, #tpu.memory_space<vmem>>, vector<32x64xbf16>
    %cst = arith.constant dense<0.000000e+00> : vector<2x64xf32>
    %3 = tpu.matmul %1, %2, %cst {dimension_numbers = #tpu.dot_dimension_numbers<[1], [0], [0], [1], [0, 0, 1, 1], [], []>} : vector<2x32xbf16>, vector<32x64xbf16>, vector<2x64xf32> -> vector<2x64xf32>
    %c0_3 = arith.constant 0 : index
    %c0_4 = arith.constant 0 : index
    %4 = vector.load %arg3[%c0_3, %c0_4] : memref<1x64xf32, #tpu.memory_space<vmem>>, vector<1x64xf32>
    %5 = vector.broadcast %4 : vector<1x64xf32> to vector<2x64xf32>
    %6 = arith.addf %3, %5 : vector<2x64xf32>
    %cst_5 = arith.constant 0.000000e+00 : f32
    %7 = vector.broadcast %cst_5 : f32 to vector<2x64xf32>
    %8 = arith.maximumf %6, %7 : vector<2x64xf32>
    %9 = arith.truncf %8 : vector<2x64xf32> to vector<2x64xbf16>
    %c0_6 = arith.constant 0 : index
    %c0_7 = arith.constant 0 : index
    %10 = vector.load %arg4[%c0_6, %c0_7] : memref<64x128xbf16, #tpu.memory_space<vmem>>, vector<64x128xbf16>
    %cst_8 = arith.constant dense<0.000000e+00> : vector<2x128xf32>
    %11 = tpu.matmul %9, %10, %cst_8 {dimension_numbers = #tpu.dot_dimension_numbers<[1], [0], [0], [1], [0, 0, 1, 1], [], []>} : vector<2x64xbf16>, vector<64x128xbf16>, vector<2x128xf32> -> vector<2x128xf32>
    %c0_9 = arith.constant 0 : index
    %c0_10 = arith.constant 0 : index
    %12 = vector.load %arg5[%c0_9, %c0_10] : memref<1x128xf32, #tpu.memory_space<vmem>>, vector<1x128xf32>
    %13 = vector.broadcast %12 : vector<1x128xf32> to vector<2x128xf32>
    %14 = arith.addf %11, %13 : vector<2x128xf32>
    %cst_11 = arith.constant 0.000000e+00 : f32
    %15 = vector.broadcast %cst_11 : f32 to vector<2x128xf32>
    %16 = arith.maximumf %14, %15 : vector<2x128xf32>
    %17 = arith.truncf %16 : vector<2x128xf32> to vector<2x128xbf16>
    %c0_12 = arith.constant 0 : index
    %c0_13 = arith.constant 0 : index
    %18 = vector.load %arg6[%c0_12, %c0_13] : memref<128x512xbf16, #tpu.memory_space<vmem>>, vector<128x512xbf16>
    %cst_14 = arith.constant dense<0.000000e+00> : vector<2x512xf32>
    %19 = tpu.matmul %17, %18, %cst_14 {dimension_numbers = #tpu.dot_dimension_numbers<[1], [0], [0], [1], [0, 0, 1, 1], [], []>} : vector<2x128xbf16>, vector<128x512xbf16>, vector<2x512xf32> -> vector<2x512xf32>
    %c0_15 = arith.constant 0 : index
    %c0_16 = arith.constant 0 : index
    %20 = vector.load %arg7[%c0_15, %c0_16] : memref<1x512xf32, #tpu.memory_space<vmem>>, vector<1x512xf32>
    %21 = vector.broadcast %20 : vector<1x512xf32> to vector<2x512xf32>
    %22 = arith.addf %19, %21 : vector<2x512xf32>
    %cst_17 = arith.constant 0.000000e+00 : f32
    %23 = vector.broadcast %cst_17 : f32 to vector<2x512xf32>
    %24 = arith.maximumf %22, %23 : vector<2x512xf32>
    %25 = arith.truncf %24 : vector<2x512xf32> to vector<2x512xbf16>
    %c0_18 = arith.constant 0 : index
    %c0_19 = arith.constant 0 : index
    %26 = vector.load %arg8[%c0_18, %c0_19] : memref<512x1024xbf16, #tpu.memory_space<vmem>>, vector<512x1024xbf16>
    %cst_20 = arith.constant dense<0.000000e+00> : vector<2x1024xf32>
    %27 = tpu.matmul %25, %26, %cst_20 {dimension_numbers = #tpu.dot_dimension_numbers<[1], [0], [0], [1], [0, 0, 1, 1], [], []>} : vector<2x512xbf16>, vector<512x1024xbf16>, vector<2x1024xf32> -> vector<2x1024xf32>
    %c0_21 = arith.constant 0 : index
    %c0_22 = arith.constant 0 : index
    %28 = vector.load %arg9[%c0_21, %c0_22] : memref<1x1024xf32, #tpu.memory_space<vmem>>, vector<1x1024xf32>
    %29 = vector.broadcast %28 : vector<1x1024xf32> to vector<2x1024xf32>
    %30 = arith.addf %27, %29 : vector<2x1024xf32>
    %cst_23 = arith.constant 0.000000e+00 : f32
    %31 = vector.broadcast %cst_23 : f32 to vector<2x1024xf32>
    %32 = arith.maximumf %30, %31 : vector<2x1024xf32>
    %33 = arith.truncf %32 : vector<2x1024xf32> to vector<2x1024xbf16>
    %c0_24 = arith.constant 0 : index
    %c0_25 = arith.constant 0 : index
    %34 = vector.load %arg10[%c0_24, %c0_25] : memref<1024x192xbf16, #tpu.memory_space<vmem>>, vector<1024x192xbf16>
    %cst_26 = arith.constant dense<0.000000e+00> : vector<2x192xf32>
    %35 = tpu.matmul %33, %34, %cst_26 {dimension_numbers = #tpu.dot_dimension_numbers<[1], [0], [0], [1], [0, 0, 1, 1], [], []>} : vector<2x1024xbf16>, vector<1024x192xbf16>, vector<2x192xf32> -> vector<2x192xf32>
    %c0_27 = arith.constant 0 : index
    %c0_28 = arith.constant 0 : index
    %36 = vector.load %arg11[%c0_27, %c0_28] : memref<1x192xf32, #tpu.memory_space<vmem>>, vector<1x192xf32>
    %37 = vector.broadcast %36 : vector<1x192xf32> to vector<2x192xf32>
    %38 = arith.addf %35, %37 : vector<2x192xf32>
    %c0_29 = arith.constant 0 : index
    %c0_30 = arith.constant 0 : index
    %39 = vector.load %arg12[%c0_29, %c0_30] : memref<2x192xf32, #tpu.memory_space<vmem>>, vector<2x192xf32>
    tpu.vector_store %arg12[%c0_29, %c0_30], %38 {strides = array<i32>} : memref<2x192xf32, #tpu.memory_space<vmem>>, vector<2x192xf32>,
    return
  }
  func.func @transform_0(%arg0: i32) -> (i32, i32) {
    %c0_i32 = arith.constant 0 : i32
    %c0_i32_0 = arith.constant 0 : i32
    return %arg0, %c0_i32 : i32, i32
  }
  func.func @transform_1(%arg0: i32) -> (i32, i32) {
    %c0_i32 = arith.constant 0 : i32
    %c0_i32_0 = arith.constant 0 : i32
    %c0_i32_1 = arith.constant 0 : i32
    return %c0_i32, %c0_i32_0 : i32, i32
  }
  func.func @transform_2(%arg0: i32) -> (i32, i32) {
    %c0_i32 = arith.constant 0 : i32
    %c0_i32_0 = arith.constant 0 : i32
    %c0_i32_1 = arith.constant 0 : i32
    return %c0_i32, %c0_i32_0 : i32, i32
  }
  func.func @transform_3(%arg0: i32) -> (i32, i32) {
    %c0_i32 = arith.constant 0 : i32
    %c0_i32_0 = arith.constant 0 : i32
    %c0_i32_1 = arith.constant 0 : i32
    return %c0_i32, %c0_i32_0 : i32, i32
  }
  func.func @transform_4(%arg0: i32) -> (i32, i32) {
    %c0_i32 = arith.constant 0 : i32
    %c0_i32_0 = arith.constant 0 : i32
    %c0_i32_1 = arith.constant 0 : i32
    return %c0_i32, %c0_i32_0 : i32, i32
  }
  func.func @transform_5(%arg0: i32) -> (i32, i32) {
    %c0_i32 = arith.constant 0 : i32
    %c0_i32_0 = arith.constant 0 : i32
    %c0_i32_1 = arith.constant 0 : i32
    return %c0_i32, %c0_i32_0 : i32, i32
  }
  func.func @transform_6(%arg0: i32) -> (i32, i32) {
    %c0_i32 = arith.constant 0 : i32
    %c0_i32_0 = arith.constant 0 : i32
    %c0_i32_1 = arith.constant 0 : i32
    return %c0_i32, %c0_i32_0 : i32, i32
  }
  func.func @transform_7(%arg0: i32) -> (i32, i32) {
    %c0_i32 = arith.constant 0 : i32
    %c0_i32_0 = arith.constant 0 : i32
    %c0_i32_1 = arith.constant 0 : i32
    return %c0_i32, %c0_i32_0 : i32, i32
  }
  func.func @transform_8(%arg0: i32) -> (i32, i32) {
    %c0_i32 = arith.constant 0 : i32
    %c0_i32_0 = arith.constant 0 : i32
    %c0_i32_1 = arith.constant 0 : i32
    return %c0_i32, %c0_i32_0 : i32, i32
  }
  func.func @transform_9(%arg0: i32) -> (i32, i32) {
    %c0_i32 = arith.constant 0 : i32
    %c0_i32_0 = arith.constant 0 : i32
    %c0_i32_1 = arith.constant 0 : i32
    return %c0_i32, %c0_i32_0 : i32, i32
  }
  func.func @transform_10(%arg0: i32) -> (i32, i32) {
    %c0_i32 = arith.constant 0 : i32
    %c0_i32_0 = arith.constant 0 : i32
    %c0_i32_1 = arith.constant 0 : i32
    return %c0_i32, %c0_i32_0 : i32, i32
  }
  func.func @transform_11(%arg0: i32) -> (i32, i32) {
    %c0_i32 = arith.constant 0 : i32
    %c0_i32_0 = arith.constant 0 : i32
    return %arg0, %c0_i32 : i32, i32
  }
}

</mosaic_0001>

<llo_original>
// kernel: tpu_custom_call.1
$region0: #{tpu_custom_call.1}
  #allocation0 [shape = 'u32[]', space=smem, size = 0x4, offset = 0x4, fixed_abs, tag = 'smem constant byte address 0x4 - core index']
  #allocation1 [shape = 'u32[72,128]{1,0:T(1,128)}', space=vmem, size = 0x9000, scoped, tag = 'internal scratch']
  %s0 = inlined_call_operand.vmem [shape: f32[2,32], index: 0, kind: input, shape index: {}]
  %s1 = inlined_call_operand.vmem [shape: bf16[32,64], index: 1, kind: input, shape index: {}]
  %s2 = inlined_call_operand.vmem [shape: f32[1,64], index: 2, kind: input, shape index: {}]
  %s3 = inlined_call_operand.vmem [shape: bf16[64,128], index: 3, kind: input, shape index: {}]
  %s4 = inlined_call_operand.vmem [shape: f32[1,128], index: 4, kind: input, shape index: {}]
  %s5 = inlined_call_operand.vmem [shape: bf16[128,512], index: 5, kind: input, shape index: {}]
  %s6 = inlined_call_operand.vmem [shape: f32[1,512], index: 6, kind: input, shape index: {}]
  %s7 = inlined_call_operand.hbm [shape: bf16[512,1024], index: 7, kind: input, shape index: {}]
  %s8 = inlined_call_operand.vmem [shape: f32[1,1024], index: 8, kind: input, shape index: {}]
  %s9 = inlined_call_operand.vmem [shape: bf16[1024,192], index: 9, kind: input, shape index: {}]
  %s10 = inlined_call_operand.vmem [shape: f32[1,192], index: 10, kind: input, shape index: {}]
  %s11 = inlined_call_operand.hbm [shape: f32[2,192], index: 11, kind: output, shape index: {}]
  %s12 = sld [smem:[#allocation0]]
  $region58: #{tpu_custom_call.1} parent=0
    _
  %s14 = ssub.s32 1, %s12
  %s15 = scalar_select 0, %s14, %s12
  $region1: #{tpu_custom_call.1} parent=0
    #allocation2 [shape = 'u8[1048576]{0}', space=vmem, size = 0x100000, scoped, tag = 'input window, operand 7, single buffered']
    #allocation3 [shape = 's32[1]{0}', space=sflag, size = 0x4, scoped, tag = 'scoped memory for tpu_custom_call.1']
    #allocation4 [shape = 's32[1]{0}', space=sflag, size = 0x4, scoped, tag = 'scoped memory for tpu_custom_call.1']
    #allocation5 [shape = 'u8[2048]{0}', space=vmem, size = 0x800, scoped, tag = 'output window, operand 0, single buffered']
    %16 = vsyncpa [#allocation3], 0
    %17 = vsyncpa [#allocation4], 0
    // Predicated region
    $region2: #{tpu_custom_call.1} parent=1 // pred_check
      _
    $region3: #{tpu_custom_call.1} parent=1 // pred_check_branch
      %19 = sbr.rel (0) target = $region5
    $region4: #{tpu_custom_call.1} parent=1 // pred_region
      _
    $region5: #{tpu_custom_call.1} parent=1 // pred_fallthru
      _
    // Predicated region
    $region6: #{tpu_custom_call.1} parent=1 // pred_check
      _
    $region7: #{tpu_custom_call.1} parent=1 // pred_check_branch
      %21 = sbr.rel (0) target = $region9
    $region8: #{tpu_custom_call.1} parent=1 // pred_region
      _
    $region9: #{tpu_custom_call.1} parent=1 // pred_fallthru
      _
    // Predicated region
    $region10: #{tpu_custom_call.1} parent=1 // pred_check
      _
    $region11: #{tpu_custom_call.1} parent=1 // pred_check_branch
      %23 = sbr.rel (0) target = $region13
    $region12: #{tpu_custom_call.1} parent=1 // pred_region
      _
    $region13: #{tpu_custom_call.1} parent=1 // pred_fallthru
      _
    // Predicated region
    $region14: #{tpu_custom_call.1} parent=1 // pred_check
      _
    $region15: #{tpu_custom_call.1} parent=1 // pred_check_branch
      %25 = sbr.rel (0) target = $region17
    $region16: #{tpu_custom_call.1} parent=1 // pred_region
      _
    $region17: #{tpu_custom_call.1} parent=1 // pred_fallthru
      _
    // Predicated region
    $region18: #{tpu_custom_call.1} parent=1 // pred_check
      _
    $region19: #{tpu_custom_call.1} parent=1 // pred_check_branch
      %27 = sbr.rel (0) target = $region21
    $region20: #{tpu_custom_call.1} parent=1 // pred_region
      _
    $region21: #{tpu_custom_call.1} parent=1 // pred_fallthru
      _
    // Predicated region
    $region22: #{tpu_custom_call.1} parent=1 // pred_check
      _
    $region23: #{tpu_custom_call.1} parent=1 // pred_check_branch
      %29 = sbr.rel (0) target = $region25
    $region24: #{tpu_custom_call.1} parent=1 // pred_region
      _
    $region25: #{tpu_custom_call.1} parent=1 // pred_fallthru
      _
    // Predicated region
    $region26: #{tpu_custom_call.1} parent=1 // pred_check
      _
    $region27: #{tpu_custom_call.1} parent=1 // pred_check_branch
      %31 = sbr.rel (0) target = $region29
    $region28: #{tpu_custom_call.1} parent=1 // pred_region
      _
    $region29: #{tpu_custom_call.1} parent=1 // pred_fallthru
      _
    // Predicated region
    $region30: #{tpu_custom_call.1} parent=1 // pred_check
      _
    $region31: #{tpu_custom_call.1} parent=1 // pred_check_branch
      %33 = sbr.rel (0) target = $region33
    $region32: #{tpu_custom_call.1} parent=1 // pred_region
      %35 = vsyncadd [#allocation3], 0
      %s36 = sshll.u32 %s7, 4
      %s37 = int_to_ptr.hbm [resolvable:$true] %s36
      %s38 = sshll.u32 [#allocation2], 4
      %s39 = int_to_ptr.vmem [resolvable:$true] %s38
      %44 = dma.hbm_to_vmem [thread:$0]  %s37, 32768, %s39, [#allocation3], 512, 512, 32
    $region33: #{tpu_custom_call.1} parent=1 // pred_fallthru
      _
    // Predicated region
    $region34: #{tpu_custom_call.1} parent=1 // pred_check
      _
    $region35: #{tpu_custom_call.1} parent=1 // pred_check_branch
      %46 = sbr.rel (0) target = $region37
    $region36: #{tpu_custom_call.1} parent=1 // pred_region
      _
    $region37: #{tpu_custom_call.1} parent=1 // pred_fallthru
      _
    // Predicated region
    $region38: #{tpu_custom_call.1} parent=1 // pred_check
      _
    $region39: #{tpu_custom_call.1} parent=1 // pred_check_branch
      %48 = sbr.rel (0) target = $region41
    $region40: #{tpu_custom_call.1} parent=1 // pred_region
      _
    $region41: #{tpu_custom_call.1} parent=1 // pred_fallthru
      _
    // Predicated region
    $region42: #{tpu_custom_call.1} parent=1 // pred_check
      _
    $region43: #{tpu_custom_call.1} parent=1 // pred_check_branch
      %50 = sbr.rel (0) target = $region45
    $region44: #{tpu_custom_call.1} parent=1 // pred_region
      _
    $region45: #{tpu_custom_call.1} parent=1 // pred_fallthru
      _
    // Predicated region
    $region46: #{tpu_custom_call.1} parent=1 // pred_check
      _
    $region47: #{tpu_custom_call.1} parent=1 // pred_check_branch
      %52 = sbr.rel (0) target = $region49
    $region48: #{tpu_custom_call.1} parent=1 // pred_region
      %54 = dma.done [#allocation3], 32768
    $region49: #{tpu_custom_call.1} parent=1 // pred_fallthru
      _
    %v56 = vld [vmem:[%s0] sm:$0x3]
    %v57 = vpack.c.bf16 %v56, %v56
    %v58 = vld [vmem:[%s1] sm:$0xf]
    %v59 = vld [vmem:[%s1 + $0x4] sm:$0xf]
    %v60 = vld [vmem:[%s1 + $0x8] sm:$0xf]
    %v61 = vld [vmem:[%s1 + $0xc] sm:$0xf]
    %v62 = vld [vmem:[%s2] sm:$0x1]
    %v64 = vperm.slane %v62, 0
    %v70 = vunpack.c.l.b16 %v58
    %v71 = vunpack.c.l.b16 %v59
    %v72 = vunpack.c.l.b16 %v60
    %v73 = vunpack.c.l.b16 %v61
    %v74 = vpack.c.b16 %v71, %v70
    %v75 = vpack.c.b16 %v73, %v72
    %vm78 = vcmask 261120
    %v80 = vsel %vm78, %v57, 0
    %82 = vmatpush.bf16.msra.mxu0 0
    %83 = vmatpush.bf16.msra.mxu0 0
    %84 = vmatpush.bf16.msra.mxu0 0
    %85 = vmatpush.bf16.msra.mxu0 0
    %86 = vmatpush.bf16.msra.mxu0 0
    %87 = vmatpush.bf16.msra.mxu0 0
    %88 = vmatpush.bf16.msra.mxu0 %v75
    %89 = vmatpush.bf16.msra.mxu0 %v74
    %90 = vmatmul.bf16.gmra.mxu0 %v80
    %v91 = vpop.f32.mrf.mxu0
    %v92 = vadd.f32 %v64, %v91
    %v93 = vpop.f32.mrf.mxu0
    %94 = vdwg.mxu0
    %v95 = vmax.f32 %v92, 0.0
    %v96 = vpack.c.bf16 %v95, %v95
    %v97 = vld [vmem:[%s3] sm:$0xf]
    %v98 = vld [vmem:[%s3 + $0x4] sm:$0xf]
    %v99 = vld [vmem:[%s3 + $0x8] sm:$0xf]
    %v100 = vld [vmem:[%s3 + $0xc] sm:$0xf]
    %v101 = vld [vmem:[%s3 + $0x10] sm:$0xf]
    %v102 = vld [vmem:[%s3 + $0x14] sm:$0xf]
    %v103 = vld [vmem:[%s3 + $0x18] sm:$0xf]
    %v104 = vld [vmem:[%s3 + $0x1c] sm:$0xf]
    %v105 = vld [vmem:[%s4] sm:$0x1]
    %v107 = vperm.slane %v105, 0
    %v117 = vunpack.c.l.b16 %v97
    %v118 = vunpack.c.l.b16 %v98
    %v119 = vunpack.c.l.b16 %v99
    %v120 = vunpack.c.l.b16 %v100
    %v121 = vunpack.c.l.b16 %v101
    %v122 = vunpack.c.l.b16 %v102
    %v123 = vunpack.c.l.b16 %v103
    %v124 = vunpack.c.l.b16 %v104
    %v125 = vpack.c.b16 %v118, %v117
    %v126 = vpack.c.b16 %v120, %v119
    %v127 = vpack.c.b16 %v122, %v121
    %v128 = vpack.c.b16 %v124, %v123
    %vm133 = vcmask 523264
    %v135 = vsel %vm133, %v96, 0
    %137 = vmatpush.bf16.msra.mxu0 0
    %138 = vmatpush.bf16.msra.mxu0 0
    %139 = vmatpush.bf16.msra.mxu0 0
    %140 = vmatpush.bf16.msra.mxu0 0
    %141 = vmatpush.bf16.msra.mxu0 %v128
    %142 = vmatpush.bf16.msra.mxu0 %v127
    %143 = vmatpush.bf16.msra.mxu0 %v126
    %144 = vmatpush.bf16.msra.mxu0 %v125
    %145 = vmatmul.bf16.gmra.mxu0 %v135
    %v146 = vpop.f32.mrf.mxu0
    %v147 = vadd.f32 %v107, %v146
    %v148 = vpop.f32.mrf.mxu0
    %149 = vdwg.mxu0
    %v150 = vmax.f32 %v147, 0.0
    %v151 = vpack.c.bf16 %v150, %v150
    %v152 = vld [vmem:[%s5] sm:$0xff]
    %v153 = vld [vmem:[%s5 + $0x8] sm:$0xff]
    %v154 = vld [vmem:[%s5 + $0x10] sm:$0xff]
    %v155 = vld [vmem:[%s5 + $0x18] sm:$0xff]
    %v156 = vld [vmem:[%s5 + $0x20] sm:$0xff]
    %v157 = vld [vmem:[%s5 + $0x28] sm:$0xff]
    %v158 = vld [vmem:[%s5 + $0x30] sm:$0xff]
    %v159 = vld [vmem:[%s5 + $0x38] sm:$0xff]
    %v160 = vld [vmem:[%s5 + $0x40] sm:$0xff]
    %v161 = vld [vmem:[%s5 + $0x48] sm:$0xff]
    %v162 = vld [vmem:[%s5 + $0x50] sm:$0xff]
    %v163 = vld [vmem:[%s5 + $0x58] sm:$0xff]
    %v164 = vld [vmem:[%s5 + $0x60] sm:$0xff]
    %v165 = vld [vmem:[%s5 + $0x68] sm:$0xff]
    %v166 = vld [vmem:[%s5 + $0x70] sm:$0xff]
    %v167 = vld [vmem:[%s5 + $0x78] sm:$0xff]
    %v168 = vld [vmem:[%s5 + $0x80] sm:$0xff]
    %v169 = vld [vmem:[%s5 + $0x88] sm:$0xff]
    %v170 = vld [vmem:[%s5 + $0x90] sm:$0xff]
    %v171 = vld [vmem:[%s5 + $0x98] sm:$0xff]
    %v172 = vld [vmem:[%s5 + $0xa0] sm:$0xff]
    %v173 = vld [vmem:[%s5 + $0xa8] sm:$0xff]
    %v174 = vld [vmem:[%s5 + $0xb0] sm:$0xff]
    %v175 = vld [vmem:[%s5 + $0xb8] sm:$0xff]
    %v176 = vld [vmem:[%s5 + $0xc0] sm:$0xff]
    %v177 = vld [vmem:[%s5 + $0xc8] sm:$0xff]
    %v178 = vld [vmem:[%s5 + $0xd0] sm:$0xff]
    %v179 = vld [vmem:[%s5 + $0xd8] sm:$0xff]
    %v180 = vld [vmem:[%s5 + $0xe0] sm:$0xff]
    %v181 = vld [vmem:[%s5 + $0xe8] sm:$0xff]
    %v182 = vld [vmem:[%s5 + $0xf0] sm:$0xff]
    %v183 = vld [vmem:[%s5 + $0xf8] sm:$0xff]
    %v184 = vld [vmem:[%s6] sm:$0xf]
    %v186 = vperm.slane %v184, 0
    %v187 = vperm.slane %v184, 1
    %v188 = vperm.slane %v184, 2
    %v189 = vperm.slane %v184, 3
    %v226 = vunpack.c.l.b16 %v152
    %v227 = vunpack.c.h.b16 %v152
    %v228 = vunpack.c.l.b16 %v153
    %v229 = vunpack.c.h.b16 %v153
    %v230 = vunpack.c.l.b16 %v154
    %v231 = vunpack.c.h.b16 %v154
    %v232 = vunpack.c.l.b16 %v155
    %v233 = vunpack.c.h.b16 %v155
    %v234 = vunpack.c.l.b16 %v156
    %v235 = vunpack.c.h.b16 %v156
    %v236 = vunpack.c.l.b16 %v157
    %v237 = vunpack.c.h.b16 %v157
    %v238 = vunpack.c.l.b16 %v158
    %v239 = vunpack.c.h.b16 %v158
    %v240 = vunpack.c.l.b16 %v159
    %v241 = vunpack.c.h.b16 %v159
    %v242 = vunpack.c.l.b16 %v160
    %v243 = vunpack.c.h.b16 %v160
    %v244 = vunpack.c.l.b16 %v161
    %v245 = vunpack.c.h.b16 %v161
    %v246 = vunpack.c.l.b16 %v162
    %v247 = vunpack.c.h.b16 %v162
    %v248 = vunpack.c.l.b16 %v163
    %v249 = vunpack.c.h.b16 %v163
    %v250 = vunpack.c.l.b16 %v164
    %v251 = vunpack.c.h.b16 %v164
    %v252 = vunpack.c.l.b16 %v165
    %v253 = vunpack.c.h.b16 %v165
    %v254 = vunpack.c.l.b16 %v166
    %v255 = vunpack.c.h.b16 %v166
    %v256 = vunpack.c.l.b16 %v167
    %v257 = vunpack.c.h.b16 %v167
    %v258 = vunpack.c.l.b16 %v168
    %v259 = vunpack.c.h.b16 %v168
    %v260 = vunpack.c.l.b16 %v169
    %v261 = vunpack.c.h.b16 %v169
    %v262 = vunpack.c.l.b16 %v170
    %v263 = vunpack.c.h.b16 %v170
    %v264 = vunpack.c.l.b16 %v171
    %v265 = vunpack.c.h.b16 %v171
    %v266 = vunpack.c.l.b16 %v172
    %v267 = vunpack.c.h.b16 %v172
    %v268 = vunpack.c.l.b16 %v173
    %v269 = vunpack.c.h.b16 %v173
    %v270 = vunpack.c.l.b16 %v174
    %v271 = vunpack.c.h.b16 %v174
    %v272 = vunpack.c.l.b16 %v175
    %v273 = vunpack.c.h.b16 %v175
    %v274 = vunpack.c.l.b16 %v176
    %v275 = vunpack.c.h.b16 %v176
    %v276 = vunpack.c.l.b16 %v177
    %v277 = vunpack.c.h.b16 %v177
    %v278 = vunpack.c.l.b16 %v178
    %v279 = vunpack.c.h.b16 %v178
    %v280 = vunpack.c.l.b16 %v179
    %v281 = vunpack.c.h.b16 %v179
    %v282 = vunpack.c.l.b16 %v180
    %v283 = vunpack.c.h.b16 %v180
    %v284 = vunpack.c.l.b16 %v181
    %v285 = vunpack.c.h.b16 %v181
    %v286 = vunpack.c.l.b16 %v182
    %v287 = vunpack.c.h.b16 %v182
    %v288 = vunpack.c.l.b16 %v183
    %v289 = vunpack.c.h.b16 %v183
    %v290 = vpack.c.b16 %v230, %v226
    %v291 = vpack.c.b16 %v231, %v227
    %v292 = vpack.c.b16 %v232, %v228
    %v293 = vpack.c.b16 %v233, %v229
    %v294 = vpack.c.b16 %v238, %v234
    %v295 = vpack.c.b16 %v239, %v235
    %v296 = vpack.c.b16 %v240, %v236
    %v297 = vpack.c.b16 %v241, %v237
    %v298 = vpack.c.b16 %v246, %v242
    %v299 = vpack.c.b16 %v247, %v243
    %v300 = vpack.c.b16 %v248, %v244
    %v301 = vpack.c.b16 %v249, %v245
    %v302 = vpack.c.b16 %v254, %v250
    %v303 = vpack.c.b16 %v255, %v251
    %v304 = vpack.c.b16 %v256, %v252
    %v305 = vpack.c.b16 %v257, %v253
    %v306 = vpack.c.b16 %v262, %v258
    %v307 = vpack.c.b16 %v263, %v259
    %v308 = vpack.c.b16 %v264, %v260
    %v309 = vpack.c.b16 %v265, %v261
    %v310 = vpack.c.b16 %v270, %v266
    %v311 = vpack.c.b16 %v271, %v267
    %v312 = vpack.c.b16 %v272, %v268
    %v313 = vpack.c.b16 %v273, %v269
    %v314 = vpack.c.b16 %v278, %v274
    %v315 = vpack.c.b16 %v279, %v275
    %v316 = vpack.c.b16 %v280, %v276
    %v317 = vpack.c.b16 %v281, %v277
    %v318 = vpack.c.b16 %v286, %v282
    %v319 = vpack.c.b16 %v287, %v283
    %v320 = vpack.c.b16 %v288, %v284
    %v321 = vpack.c.b16 %v289, %v285
    %354 = vmatpush.bf16.msra.mxu0 %v318
    %355 = vmatpush.bf16.msra.mxu0 %v314
    %356 = vmatpush.bf16.msra.mxu0 %v310
    %357 = vmatpush.bf16.msra.mxu0 %v306
    %358 = vmatpush.bf16.msra.mxu0 %v302
    %359 = vmatpush.bf16.msra.mxu0 %v298
    %360 = vmatpush.bf16.msra.mxu0 %v294
    %361 = vmatpush.bf16.msra.mxu0 %v290
    %362 = vmatmul.bf16.gmra.mxu0 %v151
    %v363 = vpop.f32.mrf.mxu0
    %v364 = vadd.f32 %v186, %v363
    %v365 = vpop.f32.mrf.mxu0
    %366 = vdwg.mxu0
    %367 = vmatpush.bf16.msra.mxu0 %v319
    %368 = vmatpush.bf16.msra.mxu0 %v315
    %369 = vmatpush.bf16.msra.mxu0 %v311
    %370 = vmatpush.bf16.msra.mxu0 %v307
    %371 = vmatpush.bf16.msra.mxu0 %v303
    %372 = vmatpush.bf16.msra.mxu0 %v299
    %373 = vmatpush.bf16.msra.mxu0 %v295
    %374 = vmatpush.bf16.msra.mxu0 %v291
    %375 = vmatmul.bf16.gmra.mxu0 %v151
    %v376 = vpop.f32.mrf.mxu0
    %v377 = vadd.f32 %v187, %v376
    %v378 = vpop.f32.mrf.mxu0
    %379 = vdwg.mxu0
    %380 = vmatpush.bf16.msra.mxu0 %v320
    %381 = vmatpush.bf16.msra.mxu0 %v316
    %382 = vmatpush.bf16.msra.mxu0 %v312
    %383 = vmatpush.bf16.msra.mxu0 %v308
    %384 = vmatpush.bf16.msra.mxu0 %v304
    %385 = vmatpush.bf16.msra.mxu0 %v300
    %386 = vmatpush.bf16.msra.mxu0 %v296
    %387 = vmatpush.bf16.msra.mxu0 %v292
    %388 = vmatmul.bf16.gmra.mxu0 %v151
    %v389 = vpop.f32.mrf.mxu0
    %v390 = vadd.f32 %v188, %v389
    %v391 = vpop.f32.mrf.mxu0
    %392 = vdwg.mxu0
    %393 = vmatpush.bf16.msra.mxu0 %v321
    %394 = vmatpush.bf16.msra.mxu0 %v317
    %395 = vmatpush.bf16.msra.mxu0 %v313
    %396 = vmatpush.bf16.msra.mxu0 %v309
    %397 = vmatpush.bf16.msra.mxu0 %v305
    %398 = vmatpush.bf16.msra.mxu0 %v301
    %399 = vmatpush.bf16.msra.mxu0 %v297
    %400 = vmatpush.bf16.msra.mxu0 %v293
    %401 = vmatmul.bf16.gmra.mxu0 %v151
    %v402 = vpop.f32.mrf.mxu0
    %v403 = vadd.f32 %v189, %v402
    %v404 = vpop.f32.mrf.mxu0
    %405 = vdwg.mxu0
    %v406 = vmax.f32 %v364, 0.0
    %v407 = vmax.f32 %v377, 0.0
    %v408 = vmax.f32 %v390, 0.0
    %v409 = vmax.f32 %v403, 0.0
    %v410 = vpack.c.bf16 %v406, %v406
    %v411 = vpack.c.bf16 %v407, %v407
    %v412 = vpack.c.bf16 %v408, %v408
    %v413 = vpack.c.bf16 %v409, %v409
    %v414 = vld [vmem:[#allocation2] sm:$0xff]
    %v415 = vld [vmem:[#allocation2 + $0x8] sm:$0xff]
    %v416 = vld [vmem:[#allocation2 + $0x10] sm:$0xff]
    %v417 = vld [vmem:[#allocation2 + $0x18] sm:$0xff]
    %v418 = vld [vmem:[#allocation2 + $0x20] sm:$0xff]
    %v419 = vld [vmem:[#allocation2 + $0x28] sm:$0xff]
    %v420 = vld [vmem:[#allocation2 + $0x30] sm:$0xff]
    %v421 = vld [vmem:[#allocation2 + $0x38] sm:$0xff]
    %v422 = vld [vmem:[#allocation2 + $0x40] sm:$0xff]
    %v423 = vld [vmem:[#allocation2 + $0x48] sm:$0xff]
    %v424 = vld [vmem:[#allocation2 + $0x50] sm:$0xff]
    %v425 = vld [vmem:[#allocation2 + $0x58] sm:$0xff]
    %v426 = vld [vmem:[#allocation2 + $0x60] sm:$0xff]
    %v427 = vld [vmem:[#allocation2 + $0x68] sm:$0xff]
    %v428 = vld [vmem:[#allocation2 + $0x70] sm:$0xff]
    %v429 = vld [vmem:[#allocation2 + $0x78] sm:$0xff]
    %v430 = vld [vmem:[#allocation2 + $0x80] sm:$0xff]
    %v431 = vld [vmem:[#allocation2 + $0x88] sm:$0xff]
    %v432 = vld [vmem:[#allocation2 + $0x90] sm:$0xff]
    %v433 = vld [vmem:[#allocation2 + $0x98] sm:$0xff]
    %v434 = vld [vmem:[#allocation2 + $0xa0] sm:$0xff]
    %v435 = vld [vmem:[#allocation2 + $0xa8] sm:$0xff]
    %v436 = vld [vmem:[#allocation2 + $0xb0] sm:$0xff]
    %v437 = vld [vmem:[#allocation2 + $0xb8] sm:$0xff]
    %v438 = vld [vmem:[#allocation2 + $0xc0] sm:$0xff]
    %v439 = vld [vmem:[#allocation2 + $0xc8] sm:$0xff]
    %v440 = vld [vmem:[#allocation2 + $0xd0] sm:$0xff]
    %v441 = vld [vmem:[#allocation2 + $0xd8] sm:$0xff]
    %v442 = vld [vmem:[#allocation2 + $0xe0] sm:$0xff]
    %v443 = vld [vmem:[#allocation2 + $0xe8] sm:$0xff]
    %v444 = vld [vmem:[#allocation2 + $0xf0] sm:$0xff]
    %v445 = vld [vmem:[#allocation2 + $0xf8] sm:$0xff]
    %v446 = vld [vmem:[#allocation2 + $0x100] sm:$0xff]
    %v447 = vld [vmem:[#allocation2 + $0x108] sm:$0xff]
    %v448 = vld [vmem:[#allocation2 + $0x110] sm:$0xff]
    %v449 = vld [vmem:[#allocation2 + $0x118] sm:$0xff]
    %v450 = vld [vmem:[#allocation2 + $0x120] sm:$0xff]
    %v451 = vld [vmem:[#allocation2 + $0x128] sm:$0xff]
    %v452 = vld [vmem:[#allocation2 + $0x130] sm:$0xff]
    %v453 = vld [vmem:[#allocation2 + $0x138] sm:$0xff]
    %v454 = vld [vmem:[#allocation2 + $0x140] sm:$0xff]
    %v455 = vld [vmem:[#allocation2 + $0x148] sm:$0xff]
    %v456 = vld [vmem:[#allocation2 + $0x150] sm:$0xff]
    %v457 = vld [vmem:[#allocation2 + $0x158] sm:$0xff]
    %v458 = vld [vmem:[#allocation2 + $0x160] sm:$0xff]
    %v459 = vld [vmem:[#allocation2 + $0x168] sm:$0xff]
    %v460 = vld [vmem:[#allocation2 + $0x170] sm:$0xff]
    %v461 = vld [vmem:[#allocation2 + $0x178] sm:$0xff]
    %v462 = vld [vmem:[#allocation2 + $0x180] sm:$0xff]
    %v463 = vld [vmem:[#allocation2 + $0x188] sm:$0xff]
    %v464 = vld [vmem:[#allocation2 + $0x190] sm:$0xff]
    %v465 = vld [vmem:[#allocation2 + $0x198] sm:$0xff]
    %v466 = vld [vmem:[#allocation2 + $0x1a0] sm:$0xff]
    %v467 = vld [vmem:[#allocation2 + $0x1a8] sm:$0xff]
    %v468 = vld [vmem:[#allocation2 + $0x1b0] sm:$0xff]
    %v469 = vld [vmem:[#allocation2 + $0x1b8] sm:$0xff]
    %v470 = vld [vmem:[#allocation2 + $0x1c0] sm:$0xff]
    %v471 = vld [vmem:[#allocation2 + $0x1c8] sm:$0xff]
    %v472 = vld [vmem:[#allocation2 + $0x1d0] sm:$0xff]
    %v473 = vld [vmem:[#allocation2 + $0x1d8] sm:$0xff]
    %v474 = vld [vmem:[#allocation2 + $0x1e0] sm:$0xff]
    %v475 = vld [vmem:[#allocation2 + $0x1e8] sm:$0xff]
    %v476 = vld [vmem:[#allocation2 + $0x1f0] sm:$0xff]
    %v477 = vld [vmem:[#allocation2 + $0x1f8] sm:$0xff]
    %v478 = vld [vmem:[#allocation2 + $0x200] sm:$0xff]
    %v479 = vld [vmem:[#allocation2 + $0x208] sm:$0xff]
    %v480 = vld [vmem:[#allocation2 + $0x210] sm:$0xff]
    %v481 = vld [vmem:[#allocation2 + $0x218] sm:$0xff]
    %v482 = vld [vmem:[#allocation2 + $0x220] sm:$0xff]
    %v483 = vld [vmem:[#allocation2 + $0x228] sm:$0xff]
    %v484 = vld [vmem:[#allocation2 + $0x230] sm:$0xff]
    %v485 = vld [vmem:[#allocation2 + $0x238] sm:$0xff]
    %v486 = vld [vmem:[#allocation2 + $0x240] sm:$0xff]
    %v487 = vld [vmem:[#allocation2 + $0x248] sm:$0xff]
    %v488 = vld [vmem:[#allocation2 + $0x250] sm:$0xff]
    %v489 = vld [vmem:[#allocation2 + $0x258] sm:$0xff]
    %v490 = vld [vmem:[#allocation2 + $0x260] sm:$0xff]
    %v491 = vld [vmem:[#allocation2 + $0x268] sm:$0xff]
    %v492 = vld [vmem:[#allocation2 + $0x270] sm:$0xff]
    %v493 = vld [vmem:[#allocation2 + $0x278] sm:$0xff]
    %v494 = vld [vmem:[#allocation2 + $0x280] sm:$0xff]
    %v495 = vld [vmem:[#allocation2 + $0x288] sm:$0xff]
    %v496 = vld [vmem:[#allocation2 + $0x290] sm:$0xff]
    %v497 = vld [vmem:[#allocation2 + $0x298] sm:$0xff]
    %v498 = vld [vmem:[#allocation2 + $0x2a0] sm:$0xff]
    %v499 = vld [vmem:[#allocation2 + $0x2a8] sm:$0xff]
    %v500 = vld [vmem:[#allocation2 + $0x2b0] sm:$0xff]
    %v501 = vld [vmem:[#allocation2 + $0x2b8] sm:$0xff]
    %v502 = vld [vmem:[#allocation2 + $0x2c0] sm:$0xff]
    %v503 = vld [vmem:[#allocation2 + $0x2c8] sm:$0xff]
    %v504 = vld [vmem:[#allocation2 + $0x2d0] sm:$0xff]
    %v505 = vld [vmem:[#allocation2 + $0x2d8] sm:$0xff]
    %v506 = vld [vmem:[#allocation2 + $0x2e0] sm:$0xff]
    %v507 = vld [vmem:[#allocation2 + $0x2e8] sm:$0xff]
    %v508 = vld [vmem:[#allocation2 + $0x2f0] sm:$0xff]
    %v509 = vld [vmem:[#allocation2 + $0x2f8] sm:$0xff]
    %v510 = vld [vmem:[#allocation2 + $0x300] sm:$0xff]
    %v511 = vld [vmem:[#allocation2 + $0x308] sm:$0xff]
    %v512 = vld [vmem:[#allocation2 + $0x310] sm:$0xff]
    %v513 = vld [vmem:[#allocation2 + $0x318] sm:$0xff]
    %v514 = vld [vmem:[#allocation2 + $0x320] sm:$0xff]
    %v515 = vld [vmem:[#allocation2 + $0x328] sm:$0xff]
    %v516 = vld [vmem:[#allocation2 + $0x330] sm:$0xff]
    %v517 = vld [vmem:[#allocation2 + $0x338] sm:$0xff]
    %v518 = vld [vmem:[#allocation2 + $0x340] sm:$0xff]
    %v519 = vld [vmem:[#allocation2 + $0x348] sm:$0xff]
    %v520 = vld [vmem:[#allocation2 + $0x350] sm:$0xff]
    %v521 = vld [vmem:[#allocation2 + $0x358] sm:$0xff]
    %v522 = vld [vmem:[#allocation2 + $0x360] sm:$0xff]
    %v523 = vld [vmem:[#allocation2 + $0x368] sm:$0xff]
    %v524 = vld [vmem:[#allocation2 + $0x370] sm:$0xff]
    %v525 = vld [vmem:[#allocation2 + $0x378] sm:$0xff]
    %v526 = vld [vmem:[#allocation2 + $0x380] sm:$0xff]
    %v527 = vld [vmem:[#allocation2 + $0x388] sm:$0xff]
    %v528 = vld [vmem:[#allocation2 + $0x390] sm:$0xff]
    %v529 = vld [vmem:[#allocation2 + $0x398] sm:$0xff]
    %v530 = vld [vmem:[#allocation2 + $0x3a0] sm:$0xff]
    %v531 = vld [vmem:[#allocation2 + $0x3a8] sm:$0xff]
    %v532 = vld [vmem:[#allocation2 + $0x3b0] sm:$0xff]
    %v533 = vld [vmem:[#allocation2 + $0x3b8] sm:$0xff]
    %v534 = vld [vmem:[#allocation2 + $0x3c0] sm:$0xff]
    %v535 = vld [vmem:[#allocation2 + $0x3c8] sm:$0xff]
    %v536 = vld [vmem:[#allocation2 + $0x3d0] sm:$0xff]
    %v537 = vld [vmem:[#allocation2 + $0x3d8] sm:$0xff]
    %v538 = vld [vmem:[#allocation2 + $0x3e0] sm:$0xff]
    %v539 = vld [vmem:[#allocation2 + $0x3e8] sm:$0xff]
    %v540 = vld [vmem:[#allocation2 + $0x3f0] sm:$0xff]
    %v541 = vld [vmem:[#allocation2 + $0x3f8] sm:$0xff]
    %v542 = vld [vmem:[#allocation2 + $0x400] sm:$0xff]
    %v543 = vld [vmem:[#allocation2 + $0x408] sm:$0xff]
    %v544 = vld [vmem:[#allocation2 + $0x410] sm:$0xff]
    %v545 = vld [vmem:[#allocation2 + $0x418] sm:$0xff]
    %v546 = vld [vmem:[#allocation2 + $0x420] sm:$0xff]
    %v547 = vld [vmem:[#allocation2 + $0x428] sm:$0xff]
    %v548 = vld [vmem:[#allocation2 + $0x430] sm:$0xff]
    %v549 = vld [vmem:[#allocation2 + $0x438] sm:$0xff]
    %v550 = vld [vmem:[#allocation2 + $0x440] sm:$0xff]
    %v551 = vld [vmem:[#allocation2 + $0x448] sm:$0xff]
    %v552 = vld [vmem:[#allocation2 + $0x450] sm:$0xff]
    %v553 = vld [vmem:[#allocation2 + $0x458] sm:$0xff]
    %v554 = vld [vmem:[#allocation2 + $0x460] sm:$0xff]
    %v555 = vld [vmem:[#allocation2 + $0x468] sm:$0xff]
    %v556 = vld [vmem:[#allocation2 + $0x470] sm:$0xff]
    %v557 = vld [vmem:[#allocation2 + $0x478] sm:$0xff]
    %v558 = vld [vmem:[#allocation2 + $0x480] sm:$0xff]
    %v559 = vld [vmem:[#allocation2 + $0x488] sm:$0xff]
    %v560 = vld [vmem:[#allocation2 + $0x490] sm:$0xff]
    %v561 = vld [vmem:[#allocation2 + $0x498] sm:$0xff]
    %v562 = vld [vmem:[#allocation2 + $0x4a0] sm:$0xff]
    %v563 = vld [vmem:[#allocation2 + $0x4a8] sm:$0xff]
    %v564 = vld [vmem:[#allocation2 + $0x4b0] sm:$0xff]
    %v565 = vld [vmem:[#allocation2 + $0x4b8] sm:$0xff]
    %v566 = vld [vmem:[#allocation2 + $0x4c0] sm:$0xff]
    %v567 = vld [vmem:[#allocation2 + $0x4c8] sm:$0xff]
    %v568 = vld [vmem:[#allocation2 + $0x4d0] sm:$0xff]
    %v569 = vld [vmem:[#allocation2 + $0x4d8] sm:$0xff]
    %v570 = vld [vmem:[#allocation2 + $0x4e0] sm:$0xff]
    %v571 = vld [vmem:[#allocation2 + $0x4e8] sm:$0xff]
    %v572 = vld [vmem:[#allocation2 + $0x4f0] sm:$0xff]
    %v573 = vld [vmem:[#allocation2 + $0x4f8] sm:$0xff]
    %v574 = vld [vmem:[#allocation2 + $0x500] sm:$0xff]
    %v575 = vld [vmem:[#allocation2 + $0x508] sm:$0xff]
    %v576 = vld [vmem:[#allocation2 + $0x510] sm:$0xff]
    %v577 = vld [vmem:[#allocation2 + $0x518] sm:$0xff]
    %v578 = vld [vmem:[#allocation2 + $0x520] sm:$0xff]
    %v579 = vld [vmem:[#allocation2 + $0x528] sm:$0xff]
    %v580 = vld [vmem:[#allocation2 + $0x530] sm:$0xff]
    %v581 = vld [vmem:[#allocation2 + $0x538] sm:$0xff]
    %v582 = vld [vmem:[#allocation2 + $0x540] sm:$0xff]
    %v583 = vld [vmem:[#allocation2 + $0x548] sm:$0xff]
    %v584 = vld [vmem:[#allocation2 + $0x550] sm:$0xff]
    %v585 = vld [vmem:[#allocation2 + $0x558] sm:$0xff]
    %v586 = vld [vmem:[#allocation2 + $0x560] sm:$0xff]
    %v587 = vld [vmem:[#allocation2 + $0x568] sm:$0xff]
    %v588 = vld [vmem:[#allocation2 + $0x570] sm:$0xff]
    %v589 = vld [vmem:[#allocation2 + $0x578] sm:$0xff]
    %v590 = vld [vmem:[#allocation2 + $0x580] sm:$0xff]
    %v591 = vld [vmem:[#allocation2 + $0x588] sm:$0xff]
    %v592 = vld [vmem:[#allocation2 + $0x590] sm:$0xff]
    %v593 = vld [vmem:[#allocation2 + $0x598] sm:$0xff]
    %v594 = vld [vmem:[#allocation2 + $0x5a0] sm:$0xff]
    %v595 = vld [vmem:[#allocation2 + $0x5a8] sm:$0xff]
    %v596 = vld [vmem:[#allocation2 + $0x5b0] sm:$0xff]
    %v597 = vld [vmem:[#allocation2 + $0x5b8] sm:$0xff]
    %v598 = vld [vmem:[#allocation2 + $0x5c0] sm:$0xff]
    %v599 = vld [vmem:[#allocation2 + $0x5c8] sm:$0xff]
    %v600 = vld [vmem:[#allocation2 + $0x5d0] sm:$0xff]
    %v601 = vld [vmem:[#allocation2 + $0x5d8] sm:$0xff]
    %v602 = vld [vmem:[#allocation2 + $0x5e0] sm:$0xff]
    %v603 = vld [vmem:[#allocation2 + $0x5e8] sm:$0xff]
    %v604 = vld [vmem:[#allocation2 + $0x5f0] sm:$0xff]
    %v605 = vld [vmem:[#allocation2 + $0x5f8] sm:$0xff]
    %v606 = vld [vmem:[#allocation2 + $0x600] sm:$0xff]
    %v607 = vld [vmem:[#allocation2 + $0x608] sm:$0xff]
    %v608 = vld [vmem:[#allocation2 + $0x610] sm:$0xff]
    %v609 = vld [vmem:[#allocation2 + $0x618] sm:$0xff]
    %v610 = vld [vmem:[#allocation2 + $0x620] sm:$0xff]
    %v611 = vld [vmem:[#allocation2 + $0x628] sm:$0xff]
    %v612 = vld [vmem:[#allocation2 + $0x630] sm:$0xff]
    %v613 = vld [vmem:[#allocation2 + $0x638] sm:$0xff]
    %v614 = vld [vmem:[#allocation2 + $0x640] sm:$0xff]
    %v615 = vld [vmem:[#allocation2 + $0x648] sm:$0xff]
    %v616 = vld [vmem:[#allocation2 + $0x650] sm:$0xff]
    %v617 = vld [vmem:[#allocation2 + $0x658] sm:$0xff]
    %v618 = vld [vmem:[#allocation2 + $0x660] sm:$0xff]
    %v619 = vld [vmem:[#allocation2 + $0x668] sm:$0xff]
    %v620 = vld [vmem:[#allocation2 + $0x670] sm:$0xff]
    %v621 = vld [vmem:[#allocation2 + $0x678] sm:$0xff]
    %v622 = vld [vmem:[#allocation2 + $0x680] sm:$0xff]
    %v623 = vld [vmem:[#allocation2 + $0x688] sm:$0xff]
    %v624 = vld [vmem:[#allocation2 + $0x690] sm:$0xff]
    %v625 = vld [vmem:[#allocation2 + $0x698] sm:$0xff]
    %v626 = vld [vmem:[#allocation2 + $0x6a0] sm:$0xff]
    %v627 = vld [vmem:[#allocation2 + $0x6a8] sm:$0xff]
    %v628 = vld [vmem:[#allocation2 + $0x6b0] sm:$0xff]
    %v629 = vld [vmem:[#allocation2 + $0x6b8] sm:$0xff]
    %v630 = vld [vmem:[#allocation2 + $0x6c0] sm:$0xff]
    %v631 = vld [vmem:[#allocation2 + $0x6c8] sm:$0xff]
    %v632 = vld [vmem:[#allocation2 + $0x6d0] sm:$0xff]
    %v633 = vld [vmem:[#allocation2 + $0x6d8] sm:$0xff]
    %v634 = vld [vmem:[#allocation2 + $0x6e0] sm:$0xff]
    %v635 = vld [vmem:[#allocation2 + $0x6e8] sm:$0xff]
    %v636 = vld [vmem:[#allocation2 + $0x6f0] sm:$0xff]
    %v637 = vld [vmem:[#allocation2 + $0x6f8] sm:$0xff]
    %v638 = vld [vmem:[#allocation2 + $0x700] sm:$0xff]
    %v639 = vld [vmem:[#allocation2 + $0x708] sm:$0xff]
    %v640 = vld [vmem:[#allocation2 + $0x710] sm:$0xff]
    %v641 = vld [vmem:[#allocation2 + $0x718] sm:$0xff]
    %v642 = vld [vmem:[#allocation2 + $0x720] sm:$0xff]
    %v643 = vld [vmem:[#allocation2 + $0x728] sm:$0xff]
    %v644 = vld [vmem:[#allocation2 + $0x730] sm:$0xff]
    %v645 = vld [vmem:[#allocation2 + $0x738] sm:$0xff]
    %v646 = vld [vmem:[#allocation2 + $0x740] sm:$0xff]
    %v647 = vld [vmem:[#allocation2 + $0x748] sm:$0xff]
    %v648 = vld [vmem:[#allocation2 + $0x750] sm:$0xff]
    %v649 = vld [vmem:[#allocation2 + $0x758] sm:$0xff]
    %v650 = vld [vmem:[#allocation2 + $0x760] sm:$0xff]
    %v651 = vld [vmem:[#allocation2 + $0x768] sm:$0xff]
    %v652 = vld [vmem:[#allocation2 + $0x770] sm:$0xff]
    %v653 = vld [vmem:[#allocation2 + $0x778] sm:$0xff]
    %v654 = vld [vmem:[#allocation2 + $0x780] sm:$0xff]
    %v655 = vld [vmem:[#allocation2 + $0x788] sm:$0xff]
    %v656 = vld [vmem:[#allocation2 + $0x790] sm:$0xff]
    %v657 = vld [vmem:[#allocation2 + $0x798] sm:$0xff]
    %v658 = vld [vmem:[#allocation2 + $0x7a0] sm:$0xff]
    %v659 = vld [vmem:[#allocation2 + $0x7a8] sm:$0xff]
    %v660 = vld [vmem:[#allocation2 + $0x7b0] sm:$0xff]
    %v661 = vld [vmem:[#allocation2 + $0x7b8] sm:$0xff]
    %v662 = vld [vmem:[#allocation2 + $0x7c0] sm:$0xff]
    %v663 = vld [vmem:[#allocation2 + $0x7c8] sm:$0xff]
    %v664 = vld [vmem:[#allocation2 + $0x7d0] sm:$0xff]
    %v665 = vld [vmem:[#allocation2 + $0x7d8] sm:$0xff]
    %v666 = vld [vmem:[#allocation2 + $0x7e0] sm:$0xff]
    %v667 = vld [vmem:[#allocation2 + $0x7e8] sm:$0xff]
    %v668 = vld [vmem:[#allocation2 + $0x7f0] sm:$0xff]
    %v669 = vld [vmem:[#allocation2 + $0x7f8] sm:$0xff]
    %v670 = vld [vmem:[%s8] sm:$0xff]
    %v672 = vperm.slane %v670, 0
    %v673 = vperm.slane %v670, 1
    %v674 = vperm.slane %v670, 2
    %v675 = vperm.slane %v670, 3
    %v676 = vperm.slane %v670, 4
    %v677 = vperm.slane %v670, 5
    %v678 = vperm.slane %v670, 6
    %v679 = vperm.slane %v670, 7
    %v944 = vunpack.c.l.b16 %v414
    %v945 = vunpack.c.h.b16 %v414
    %v946 = vunpack.c.l.b16 %v415
    %v947 = vunpack.c.h.b16 %v415
    %v948 = vunpack.c.l.b16 %v416
    %v949 = vunpack.c.h.b16 %v416
    %v950 = vunpack.c.l.b16 %v417
    %v951 = vunpack.c.h.b16 %v417
    %v952 = vunpack.c.l.b16 %v418
    %v953 = vunpack.c.h.b16 %v418
    %v954 = vunpack.c.l.b16 %v419
    %v955 = vunpack.c.h.b16 %v419
    %v956 = vunpack.c.l.b16 %v420
    %v957 = vunpack.c.h.b16 %v420
    %v958 = vunpack.c.l.b16 %v421
    %v959 = vunpack.c.h.b16 %v421
    %v960 = vunpack.c.l.b16 %v422
    %v961 = vunpack.c.h.b16 %v422
    %v962 = vunpack.c.l.b16 %v423
    %v963 = vunpack.c.h.b16 %v423
    %v964 = vunpack.c.l.b16 %v424
    %v965 = vunpack.c.h.b16 %v424
    %v966 = vunpack.c.l.b16 %v425
    %v967 = vunpack.c.h.b16 %v425
    %v968 = vunpack.c.l.b16 %v426
    %v969 = vunpack.c.h.b16 %v426
    %v970 = vunpack.c.l.b16 %v427
    %v971 = vunpack.c.h.b16 %v427
    %v972 = vunpack.c.l.b16 %v428
    %v973 = vunpack.c.h.b16 %v428
    %v974 = vunpack.c.l.b16 %v429
    %v975 = vunpack.c.h.b16 %v429
    %v976 = vunpack.c.l.b16 %v430
    %v977 = vunpack.c.h.b16 %v430
    %v978 = vunpack.c.l.b16 %v431
    %v979 = vunpack.c.h.b16 %v431
    %v980 = vunpack.c.l.b16 %v432
    %v981 = vunpack.c.h.b16 %v432
    %v982 = vunpack.c.l.b16 %v433
    %v983 = vunpack.c.h.b16 %v433
    %v984 = vunpack.c.l.b16 %v434
    %v985 = vunpack.c.h.b16 %v434
    %v986 = vunpack.c.l.b16 %v435
    %v987 = vunpack.c.h.b16 %v435
    %v988 = vunpack.c.l.b16 %v436
    %v989 = vunpack.c.h.b16 %v436
    %v990 = vunpack.c.l.b16 %v437
    %v991 = vunpack.c.h.b16 %v437
    %v992 = vunpack.c.l.b16 %v438
    %v993 = vunpack.c.h.b16 %v438
    %v994 = vunpack.c.l.b16 %v439
    %v995 = vunpack.c.h.b16 %v439
    %v996 = vunpack.c.l.b16 %v440
    %v997 = vunpack.c.h.b16 %v440
    %v998 = vunpack.c.l.b16 %v441
    %v999 = vunpack.c.h.b16 %v441
    %v1000 = vunpack.c.l.b16 %v442
    %v1001 = vunpack.c.h.b16 %v442
    %v1002 = vunpack.c.l.b16 %v443
    %v1003 = vunpack.c.h.b16 %v443
    %v1004 = vunpack.c.l.b16 %v444
    %v1005 = vunpack.c.h.b16 %v444
    %v1006 = vunpack.c.l.b16 %v445
    %v1007 = vunpack.c.h.b16 %v445
    %v1008 = vunpack.c.l.b16 %v446
    %v1009 = vunpack.c.h.b16 %v446
    %v1010 = vunpack.c.l.b16 %v447
    %v1011 = vunpack.c.h.b16 %v447
    %v1012 = vunpack.c.l.b16 %v448
    %v1013 = vunpack.c.h.b16 %v448
    %v1014 = vunpack.c.l.b16 %v449
    %v1015 = vunpack.c.h.b16 %v449
    %v1016 = vunpack.c.l.b16 %v450
    %v1017 = vunpack.c.h.b16 %v450
    %v1018 = vunpack.c.l.b16 %v451
    %v1019 = vunpack.c.h.b16 %v451
    %v1020 = vunpack.c.l.b16 %v452
    %v1021 = vunpack.c.h.b16 %v452
    %v1022 = vunpack.c.l.b16 %v453
    %v1023 = vunpack.c.h.b16 %v453
    %v1024 = vunpack.c.l.b16 %v454
    %v1025 = vunpack.c.h.b16 %v454
    %v1026 = vunpack.c.l.b16 %v455
    %v1027 = vunpack.c.h.b16 %v455
    %v1028 = vunpack.c.l.b16 %v456
    %v1029 = vunpack.c.h.b16 %v456
    %v1030 = vunpack.c.l.b16 %v457
    %v1031 = vunpack.c.h.b16 %v457
    %v1032 = vunpack.c.l.b16 %v458
    %v1033 = vunpack.c.h.b16 %v458
    %v1034 = vunpack.c.l.b16 %v459
    %v1035 = vunpack.c.h.b16 %v459
    %v1036 = vunpack.c.l.b16 %v460
    %v1037 = vunpack.c.h.b16 %v460
    %v1038 = vunpack.c.l.b16 %v461
    %v1039 = vunpack.c.h.b16 %v461
    %v1040 = vunpack.c.l.b16 %v462
    %v1041 = vunpack.c.h.b16 %v462
    %v1042 = vunpack.c.l.b16 %v463
    %v1043 = vunpack.c.h.b16 %v463
    %v1044 = vunpack.c.l.b16 %v464
    %v1045 = vunpack.c.h.b16 %v464
    %v1046 = vunpack.c.l.b16 %v465
    %v1047 = vunpack.c.h.b16 %v465
    %v1048 = vunpack.c.l.b16 %v466
    %v1049 = vunpack.c.h.b16 %v466
    %v1050 = vunpack.c.l.b16 %v467
    %v1051 = vunpack.c.h.b16 %v467
    %v1052 = vunpack.c.l.b16 %v468
    %v1053 = vunpack.c.h.b16 %v468
    %v1054 = vunpack.c.l.b16 %v469
    %v1055 = vunpack.c.h.b16 %v469
    %v1056 = vunpack.c.l.b16 %v470
    %v1057 = vunpack.c.h.b16 %v470
    %v1058 = vunpack.c.l.b16 %v471
    %v1059 = vunpack.c.h.b16 %v471
    %v1060 = vunpack.c.l.b16 %v472
    %v1061 = vunpack.c.h.b16 %v472
    %v1062 = vunpack.c.l.b16 %v473
    %v1063 = vunpack.c.h.b16 %v473
    %v1064 = vunpack.c.l.b16 %v474
    %v1065 = vunpack.c.h.b16 %v474
    %v1066 = vunpack.c.l.b16 %v475
    %v1067 = vunpack.c.h.b16 %v475
    %v1068 = vunpack.c.l.b16 %v476
    %v1069 = vunpack.c.h.b16 %v476
    %v1070 = vunpack.c.l.b16 %v477
    %v1071 = vunpack.c.h.b16 %v477
    %v1072 = vunpack.c.l.b16 %v478
    %v1073 = vunpack.c.h.b16 %v478
    %v1074 = vunpack.c.l.b16 %v479
    %v1075 = vunpack.c.h.b16 %v479
    %v1076 = vunpack.c.l.b16 %v480
    %v1077 = vunpack.c.h.b16 %v480
    %v1078 = vunpack.c.l.b16 %v481
    %v1079 = vunpack.c.h.b16 %v481
    %v1080 = vunpack.c.l.b16 %v482
    %v1081 = vunpack.c.h.b16 %v482
    %v1082 = vunpack.c.l.b16 %v483
    %v1083 = vunpack.c.h.b16 %v483
    %v1084 = vunpack.c.l.b16 %v484
    %v1085 = vunpack.c.h.b16 %v484
    %v1086 = vunpack.c.l.b16 %v485
    %v1087 = vunpack.c.h.b16 %v485
    %v1088 = vunpack.c.l.b16 %v486
    %v1089 = vunpack.c.h.b16 %v486
    %v1090 = vunpack.c.l.b16 %v487
    %v1091 = vunpack.c.h.b16 %v487
    %v1092 = vunpack.c.l.b16 %v488
    %v1093 = vunpack.c.h.b16 %v488
    %v1094 = vunpack.c.l.b16 %v489
    %v1095 = vunpack.c.h.b16 %v489
    %v1096 = vunpack.c.l.b16 %v490
    %v1097 = vunpack.c.h.b16 %v490
    %v1098 = vunpack.c.l.b16 %v491
    %v1099 = vunpack.c.h.b16 %v491
    %v1100 = vunpack.c.l.b16 %v492
    %v1101 = vunpack.c.h.b16 %v492
    %v1102 = vunpack.c.l.b16 %v493
    %v1103 = vunpack.c.h.b16 %v493
    %v1104 = vunpack.c.l.b16 %v494
    %v1105 = vunpack.c.h.b16 %v494
    %v1106 = vunpack.c.l.b16 %v495
    %v1107 = vunpack.c.h.b16 %v495
    %v1108 = vunpack.c.l.b16 %v496
    %v1109 = vunpack.c.h.b16 %v496
    %v1110 = vunpack.c.l.b16 %v497
    %v1111 = vunpack.c.h.b16 %v497
    %v1112 = vunpack.c.l.b16 %v498
    %v1113 = vunpack.c.h.b16 %v498
    %v1114 = vunpack.c.l.b16 %v499
    %v1115 = vunpack.c.h.b16 %v499
    %v1116 = vunpack.c.l.b16 %v500
    %v1117 = vunpack.c.h.b16 %v500
    %v1118 = vunpack.c.l.b16 %v501
    %v1119 = vunpack.c.h.b16 %v501
    %v1120 = vunpack.c.l.b16 %v502
    %v1121 = vunpack.c.h.b16 %v502
    %v1122 = vunpack.c.l.b16 %v503
    %v1123 = vunpack.c.h.b16 %v503
    %v1124 = vunpack.c.l.b16 %v504
    %v1125 = vunpack.c.h.b16 %v504
    %v1126 = vunpack.c.l.b16 %v505
    %v1127 = vunpack.c.h.b16 %v505
    %v1128 = vunpack.c.l.b16 %v506
    %v1129 = vunpack.c.h.b16 %v506
    %v1130 = vunpack.c.l.b16 %v507
    %v1131 = vunpack.c.h.b16 %v507
    %v1132 = vunpack.c.l.b16 %v508
    %v1133 = vunpack.c.h.b16 %v508
    %v1134 = vunpack.c.l.b16 %v509
    %v1135 = vunpack.c.h.b16 %v509
    %v1136 = vunpack.c.l.b16 %v510
    %v1137 = vunpack.c.h.b16 %v510
    %v1138 = vunpack.c.l.b16 %v511
    %v1139 = vunpack.c.h.b16 %v511
    %v1140 = vunpack.c.l.b16 %v512
    %v1141 = vunpack.c.h.b16 %v512
    %v1142 = vunpack.c.l.b16 %v513
    %v1143 = vunpack.c.h.b16 %v513
    %v1144 = vunpack.c.l.b16 %v514
    %v1145 = vunpack.c.h.b16 %v514
    %v1146 = vunpack.c.l.b16 %v515
    %v1147 = vunpack.c.h.b16 %v515
    %v1148 = vunpack.c.l.b16 %v516
    %v1149 = vunpack.c.h.b16 %v516
    %v1150 = vunpack.c.l.b16 %v517
    %v1151 = vunpack.c.h.b16 %v517
    %v1152 = vunpack.c.l.b16 %v518
    %v1153 = vunpack.c.h.b16 %v518
    %v1154 = vunpack.c.l.b16 %v519
    %v1155 = vunpack.c.h.b16 %v519
    %v1156 = vunpack.c.l.b16 %v520
    %v1157 = vunpack.c.h.b16 %v520
    %v1158 = vunpack.c.l.b16 %v521
    %v1159 = vunpack.c.h.b16 %v521
    %v1160 = vunpack.c.l.b16 %v522
    %v1161 = vunpack.c.h.b16 %v522
    %v1162 = vunpack.c.l.b16 %v523
    %v1163 = vunpack.c.h.b16 %v523
    %v1164 = vunpack.c.l.b16 %v524
    %v1165 = vunpack.c.h.b16 %v524
    %v1166 = vunpack.c.l.b16 %v525
    %v1167 = vunpack.c.h.b16 %v525
    %v1168 = vunpack.c.l.b16 %v526
    %v1169 = vunpack.c.h.b16 %v526
    %v1170 = vunpack.c.l.b16 %v527
    %v1171 = vunpack.c.h.b16 %v527
    %v1172 = vunpack.c.l.b16 %v528
    %v1173 = vunpack.c.h.b16 %v528
    %v1174 = vunpack.c.l.b16 %v529
    %v1175 = vunpack.c.h.b16 %v529
    %v1176 = vunpack.c.l.b16 %v530
    %v1177 = vunpack.c.h.b16 %v530
    %v1178 = vunpack.c.l.b16 %v531
    %v1179 = vunpack.c.h.b16 %v531
    %v1180 = vunpack.c.l.b16 %v532
    %v1181 = vunpack.c.h.b16 %v532
    %v1182 = vunpack.c.l.b16 %v533
    %v1183 = vunpack.c.h.b16 %v533
    %v1184 = vunpack.c.l.b16 %v534
    %v1185 = vunpack.c.h.b16 %v534
    %v1186 = vunpack.c.l.b16 %v535
    %v1187 = vunpack.c.h.b16 %v535
    %v1188 = vunpack.c.l.b16 %v536
    %v1189 = vunpack.c.h.b16 %v536
    %v1190 = vunpack.c.l.b16 %v537
    %v1191 = vunpack.c.h.b16 %v537
    %v1192 = vunpack.c.l.b16 %v538
    %v1193 = vunpack.c.h.b16 %v538
    %v1194 = vunpack.c.l.b16 %v539
    %v1195 = vunpack.c.h.b16 %v539
    %v1196 = vunpack.c.l.b16 %v540
    %v1197 = vunpack.c.h.b16 %v540
    %v1198 = vunpack.c.l.b16 %v541
    %v1199 = vunpack.c.h.b16 %v541
    %v1200 = vunpack.c.l.b16 %v542
    %v1201 = vunpack.c.h.b16 %v542
    %v1202 = vunpack.c.l.b16 %v543
    %v1203 = vunpack.c.h.b16 %v543
    %v1204 = vunpack.c.l.b16 %v544
    %v1205 = vunpack.c.h.b16 %v544
    %v1206 = vunpack.c.l.b16 %v545
    %v1207 = vunpack.c.h.b16 %v545
    %v1208 = vunpack.c.l.b16 %v546
    %v1209 = vunpack.c.h.b16 %v546
    %v1210 = vunpack.c.l.b16 %v547
    %v1211 = vunpack.c.h.b16 %v547
    %v1212 = vunpack.c.l.b16 %v548
    %v1213 = vunpack.c.h.b16 %v548
    %v1214 = vunpack.c.l.b16 %v549
    %v1215 = vunpack.c.h.b16 %v549
    %v1216 = vunpack.c.l.b16 %v550
    %v1217 = vunpack.c.h.b16 %v550
    %v1218 = vunpack.c.l.b16 %v551
    %v1219 = vunpack.c.h.b16 %v551
    %v1220 = vunpack.c.l.b16 %v552
    %v1221 = vunpack.c.h.b16 %v552
    %v1222 = vunpack.c.l.b16 %v553
    %v1223 = vunpack.c.h.b16 %v553
    %v1224 = vunpack.c.l.b16 %v554
    %v1225 = vunpack.c.h.b16 %v554
    %v1226 = vunpack.c.l.b16 %v555
    %v1227 = vunpack.c.h.b16 %v555
    %v1228 = vunpack.c.l.b16 %v556
    %v1229 = vunpack.c.h.b16 %v556
    %v1230 = vunpack.c.l.b16 %v557
    %v1231 = vunpack.c.h.b16 %v557
    %v1232 = vunpack.c.l.b16 %v558
    %v1233 = vunpack.c.h.b16 %v558
    %v1234 = vunpack.c.l.b16 %v559
    %v1235 = vunpack.c.h.b16 %v559
    %v1236 = vunpack.c.l.b16 %v560
    %v1237 = vunpack.c.h.b16 %v560
    %v1238 = vunpack.c.l.b16 %v561
    %v1239 = vunpack.c.h.b16 %v561
    %v1240 = vunpack.c.l.b16 %v562
    %v1241 = vunpack.c.h.b16 %v562
    %v1242 = vunpack.c.l.b16 %v563
    %v1243 = vunpack.c.h.b16 %v563
    %v1244 = vunpack.c.l.b16 %v564
    %v1245 = vunpack.c.h.b16 %v564
    %v1246 = vunpack.c.l.b16 %v565
    %v1247 = vunpack.c.h.b16 %v565
    %v1248 = vunpack.c.l.b16 %v566
    %v1249 = vunpack.c.h.b16 %v566
    %v1250 = vunpack.c.l.b16 %v567
    %v1251 = vunpack.c.h.b16 %v567
    %v1252 = vunpack.c.l.b16 %v568
    %v1253 = vunpack.c.h.b16 %v568
    %v1254 = vunpack.c.l.b16 %v569
    %v1255 = vunpack.c.h.b16 %v569
    %v1256 = vunpack.c.l.b16 %v570
    %v1257 = vunpack.c.h.b16 %v570
    %v1258 = vunpack.c.l.b16 %v571
    %v1259 = vunpack.c.h.b16 %v571
    %v1260 = vunpack.c.l.b16 %v572
    %v1261 = vunpack.c.h.b16 %v572
    %v1262 = vunpack.c.l.b16 %v573
    %v1263 = vunpack.c.h.b16 %v573
    %v1264 = vunpack.c.l.b16 %v574
    %v1265 = vunpack.c.h.b16 %v574
    %v1266 = vunpack.c.l.b16 %v575
    %v1267 = vunpack.c.h.b16 %v575
    %v1268 = vunpack.c.l.b16 %v576
    %v1269 = vunpack.c.h.b16 %v576
    %v1270 = vunpack.c.l.b16 %v577
    %v1271 = vunpack.c.h.b16 %v577
    %v1272 = vunpack.c.l.b16 %v578
    %v1273 = vunpack.c.h.b16 %v578
    %v1274 = vunpack.c.l.b16 %v579
    %v1275 = vunpack.c.h.b16 %v579
    %v1276 = vunpack.c.l.b16 %v580
    %v1277 = vunpack.c.h.b16 %v580
    %v1278 = vunpack.c.l.b16 %v581
    %v1279 = vunpack.c.h.b16 %v581
    %v1280 = vunpack.c.l.b16 %v582
    %v1281 = vunpack.c.h.b16 %v582
    %v1282 = vunpack.c.l.b16 %v583
    %v1283 = vunpack.c.h.b16 %v583
    %v1284 = vunpack.c.l.b16 %v584
    %v1285 = vunpack.c.h.b16 %v584
    %v1286 = vunpack.c.l.b16 %v585
    %v1287 = vunpack.c.h.b16 %v585
    %v1288 = vunpack.c.l.b16 %v586
    %v1289 = vunpack.c.h.b16 %v586
    %v1290 = vunpack.c.l.b16 %v587
    %v1291 = vunpack.c.h.b16 %v587
    %v1292 = vunpack.c.l.b16 %v588
    %v1293 = vunpack.c.h.b16 %v588
    %v1294 = vunpack.c.l.b16 %v589
    %v1295 = vunpack.c.h.b16 %v589
    %v1296 = vunpack.c.l.b16 %v590
    %v1297 = vunpack.c.h.b16 %v590
    %v1298 = vunpack.c.l.b16 %v591
    %v1299 = vunpack.c.h.b16 %v591
    %v1300 = vunpack.c.l.b16 %v592
    %v1301 = vunpack.c.h.b16 %v592
    %v1302 = vunpack.c.l.b16 %v593
    %v1303 = vunpack.c.h.b16 %v593
    %v1304 = vunpack.c.l.b16 %v594
    %v1305 = vunpack.c.h.b16 %v594
    %v1306 = vunpack.c.l.b16 %v595
    %v1307 = vunpack.c.h.b16 %v595
    %v1308 = vunpack.c.l.b16 %v596
    %v1309 = vunpack.c.h.b16 %v596
    %v1310 = vunpack.c.l.b16 %v597
    %v1311 = vunpack.c.h.b16 %v597
    %v1312 = vunpack.c.l.b16 %v598
    %v1313 = vunpack.c.h.b16 %v598
    %v1314 = vunpack.c.l.b16 %v599
    %v1315 = vunpack.c.h.b16 %v599
    %v1316 = vunpack.c.l.b16 %v600
    %v1317 = vunpack.c.h.b16 %v600
    %v1318 = vunpack.c.l.b16 %v601
    %v1319 = vunpack.c.h.b16 %v601
    %v1320 = vunpack.c.l.b16 %v602
    %v1321 = vunpack.c.h.b16 %v602
    %v1322 = vunpack.c.l.b16 %v603
    %v1323 = vunpack.c.h.b16 %v603
    %v1324 = vunpack.c.l.b16 %v604
    %v1325 = vunpack.c.h.b16 %v604
    %v1326 = vunpack.c.l.b16 %v605
    %v1327 = vunpack.c.h.b16 %v605
    %v1328 = vunpack.c.l.b16 %v606
    %v1329 = vunpack.c.h.b16 %v606
    %v1330 = vunpack.c.l.b16 %v607
    %v1331 = vunpack.c.h.b16 %v607
    %v1332 = vunpack.c.l.b16 %v608
    %v1333 = vunpack.c.h.b16 %v608
    %v1334 = vunpack.c.l.b16 %v609
    %v1335 = vunpack.c.h.b16 %v609
    %v1336 = vunpack.c.l.b16 %v610
    %v1337 = vunpack.c.h.b16 %v610
    %v1338 = vunpack.c.l.b16 %v611
    %v1339 = vunpack.c.h.b16 %v611
    %v1340 = vunpack.c.l.b16 %v612
    %v1341 = vunpack.c.h.b16 %v612
    %v1342 = vunpack.c.l.b16 %v613
    %v1343 = vunpack.c.h.b16 %v613
    %v1344 = vunpack.c.l.b16 %v614
    %v1345 = vunpack.c.h.b16 %v614
    %v1346 = vunpack.c.l.b16 %v615
    %v1347 = vunpack.c.h.b16 %v615
    %v1348 = vunpack.c.l.b16 %v616
    %v1349 = vunpack.c.h.b16 %v616
    %v1350 = vunpack.c.l.b16 %v617
    %v1351 = vunpack.c.h.b16 %v617
    %v1352 = vunpack.c.l.b16 %v618
    %v1353 = vunpack.c.h.b16 %v618
    %v1354 = vunpack.c.l.b16 %v619
    %v1355 = vunpack.c.h.b16 %v619
    %v1356 = vunpack.c.l.b16 %v620
    %v1357 = vunpack.c.h.b16 %v620
    %v1358 = vunpack.c.l.b16 %v621
    %v1359 = vunpack.c.h.b16 %v621
    %v1360 = vunpack.c.l.b16 %v622
    %v1361 = vunpack.c.h.b16 %v622
    %v1362 = vunpack.c.l.b16 %v623
    %v1363 = vunpack.c.h.b16 %v623
    %v1364 = vunpack.c.l.b16 %v624
    %v1365 = vunpack.c.h.b16 %v624
    %v1366 = vunpack.c.l.b16 %v625
    %v1367 = vunpack.c.h.b16 %v625
    %v1368 = vunpack.c.l.b16 %v626
    %v1369 = vunpack.c.h.b16 %v626
    %v1370 = vunpack.c.l.b16 %v627
    %v1371 = vunpack.c.h.b16 %v627
    %v1372 = vunpack.c.l.b16 %v628
    %v1373 = vunpack.c.h.b16 %v628
    %v1374 = vunpack.c.l.b16 %v629
    %v1375 = vunpack.c.h.b16 %v629
    %v1376 = vunpack.c.l.b16 %v630
    %v1377 = vunpack.c.h.b16 %v630
    %v1378 = vunpack.c.l.b16 %v631
    %v1379 = vunpack.c.h.b16 %v631
    %v1380 = vunpack.c.l.b16 %v632
    %v1381 = vunpack.c.h.b16 %v632
    %v1382 = vunpack.c.l.b16 %v633
    %v1383 = vunpack.c.h.b16 %v633
    %v1384 = vunpack.c.l.b16 %v634
    %v1385 = vunpack.c.h.b16 %v634
    %v1386 = vunpack.c.l.b16 %v635
    %v1387 = vunpack.c.h.b16 %v635
    %v1388 = vunpack.c.l.b16 %v636
    %v1389 = vunpack.c.h.b16 %v636
    %v1390 = vunpack.c.l.b16 %v637
    %v1391 = vunpack.c.h.b16 %v637
    %v1392 = vunpack.c.l.b16 %v638
    %v1393 = vunpack.c.h.b16 %v638
    %v1394 = vunpack.c.l.b16 %v639
    %v1395 = vunpack.c.h.b16 %v639
    %v1396 = vunpack.c.l.b16 %v640
    %v1397 = vunpack.c.h.b16 %v640
    %v1398 = vunpack.c.l.b16 %v641
    %v1399 = vunpack.c.h.b16 %v641
    %v1400 = vunpack.c.l.b16 %v642
    %v1401 = vunpack.c.h.b16 %v642
    %v1402 = vunpack.c.l.b16 %v643
    %v1403 = vunpack.c.h.b16 %v643
    %v1404 = vunpack.c.l.b16 %v644
    %v1405 = vunpack.c.h.b16 %v644
    %v1406 = vunpack.c.l.b16 %v645
    %v1407 = vunpack.c.h.b16 %v645
    %v1408 = vunpack.c.l.b16 %v646
    %v1409 = vunpack.c.h.b16 %v646
    %v1410 = vunpack.c.l.b16 %v647
    %v1411 = vunpack.c.h.b16 %v647
    %v1412 = vunpack.c.l.b16 %v648
    %v1413 = vunpack.c.h.b16 %v648
    %v1414 = vunpack.c.l.b16 %v649
    %v1415 = vunpack.c.h.b16 %v649
    %v1416 = vunpack.c.l.b16 %v650
    %v1417 = vunpack.c.h.b16 %v650
    %v1418 = vunpack.c.l.b16 %v651
    %v1419 = vunpack.c.h.b16 %v651
    %v1420 = vunpack.c.l.b16 %v652
    %v1421 = vunpack.c.h.b16 %v652
    %v1422 = vunpack.c.l.b16 %v653
    %v1423 = vunpack.c.h.b16 %v653
    %v1424 = vunpack.c.l.b16 %v654
    %v1425 = vunpack.c.h.b16 %v654
    %v1426 = vunpack.c.l.b16 %v655
    %v1427 = vunpack.c.h.b16 %v655
    %v1428 = vunpack.c.l.b16 %v656
    %v1429 = vunpack.c.h.b16 %v656
    %v1430 = vunpack.c.l.b16 %v657
    %v1431 = vunpack.c.h.b16 %v657
    %v1432 = vunpack.c.l.b16 %v658
    %v1433 = vunpack.c.h.b16 %v658
    %v1434 = vunpack.c.l.b16 %v659
    %v1435 = vunpack.c.h.b16 %v659
    %v1436 = vunpack.c.l.b16 %v660
    %v1437 = vunpack.c.h.b16 %v660
    %v1438 = vunpack.c.l.b16 %v661
    %v1439 = vunpack.c.h.b16 %v661
    %v1440 = vunpack.c.l.b16 %v662
    %v1441 = vunpack.c.h.b16 %v662
    %v1442 = vunpack.c.l.b16 %v663
    %v1443 = vunpack.c.h.b16 %v663
    %v1444 = vunpack.c.l.b16 %v664
    %v1445 = vunpack.c.h.b16 %v664
    %v1446 = vunpack.c.l.b16 %v665
    %v1447 = vunpack.c.h.b16 %v665
    %v1448 = vunpack.c.l.b16 %v666
    %v1449 = vunpack.c.h.b16 %v666
    %v1450 = vunpack.c.l.b16 %v667
    %v1451 = vunpack.c.h.b16 %v667
    %v1452 = vunpack.c.l.b16 %v668
    %v1453 = vunpack.c.h.b16 %v668
    %v1454 = vunpack.c.l.b16 %v669
    %v1455 = vunpack.c.h.b16 %v669
    %v1456 = vpack.c.b16 %v952, %v944
    %v1457 = vpack.c.b16 %v953, %v945
    %v1458 = vpack.c.b16 %v954, %v946
    %v1459 = vpack.c.b16 %v955, %v947
    %v1460 = vpack.c.b16 %v956, %v948
    %v1461 = vpack.c.b16 %v957, %v949
    %v1462 = vpack.c.b16 %v958, %v950
    %v1463 = vpack.c.b16 %v959, %v951
    %v1464 = vpack.c.b16 %v968, %v960
    %v1465 = vpack.c.b16 %v969, %v961
    %v1466 = vpack.c.b16 %v970, %v962
    %v1467 = vpack.c.b16 %v971, %v963
    %v1468 = vpack.c.b16 %v972, %v964
    %v1469 = vpack.c.b16 %v973, %v965
    %v1470 = vpack.c.b16 %v974, %v966
    %v1471 = vpack.c.b16 %v975, %v967
    %v1472 = vpack.c.b16 %v984, %v976
    %v1473 = vpack.c.b16 %v985, %v977
    %v1474 = vpack.c.b16 %v986, %v978
    %v1475 = vpack.c.b16 %v987, %v979
    %v1476 = vpack.c.b16 %v988, %v980
    %v1477 = vpack.c.b16 %v989, %v981
    %v1478 = vpack.c.b16 %v990, %v982
    %v1479 = vpack.c.b16 %v991, %v983
    %v1480 = vpack.c.b16 %v1000, %v992
    %v1481 = vpack.c.b16 %v1001, %v993
    %v1482 = vpack.c.b16 %v1002, %v994
    %v1483 = vpack.c.b16 %v1003, %v995
    %v1484 = vpack.c.b16 %v1004, %v996
    %v1485 = vpack.c.b16 %v1005, %v997
    %v1486 = vpack.c.b16 %v1006, %v998
    %v1487 = vpack.c.b16 %v1007, %v999
    %v1488 = vpack.c.b16 %v1016, %v1008
    %v1489 = vpack.c.b16 %v1017, %v1009
    %v1490 = vpack.c.b16 %v1018, %v1010
    %v1491 = vpack.c.b16 %v1019, %v1011
    %v1492 = vpack.c.b16 %v1020, %v1012
    %v1493 = vpack.c.b16 %v1021, %v1013
    %v1494 = vpack.c.b16 %v1022, %v1014
    %v1495 = vpack.c.b16 %v1023, %v1015
    %v1496 = vpack.c.b16 %v1032, %v1024
    %v1497 = vpack.c.b16 %v1033, %v1025
    %v1498 = vpack.c.b16 %v1034, %v1026
    %v1499 = vpack.c.b16 %v1035, %v1027
    %v1500 = vpack.c.b16 %v1036, %v1028
    %v1501 = vpack.c.b16 %v1037, %v1029
    %v1502 = vpack.c.b16 %v1038, %v1030
    %v1503 = vpack.c.b16 %v1039, %v1031
    %v1504 = vpack.c.b16 %v1048, %v1040
    %v1505 = vpack.c.b16 %v1049, %v1041
    %v1506 = vpack.c.b16 %v1050, %v1042
    %v1507 = vpack.c.b16 %v1051, %v1043
    %v1508 = vpack.c.b16 %v1052, %v1044
    %v1509 = vpack.c.b16 %v1053, %v1045
    %v1510 = vpack.c.b16 %v1054, %v1046
    %v1511 = vpack.c.b16 %v1055, %v1047
    %v1512 = vpack.c.b16 %v1064, %v1056
    %v1513 = vpack.c.b16 %v1065, %v1057
    %v1514 = vpack.c.b16 %v1066, %v1058
    %v1515 = vpack.c.b16 %v1067, %v1059
    %v1516 = vpack.c.b16 %v1068, %v1060
    %v1517 = vpack.c.b16 %v1069, %v1061
    %v1518 = vpack.c.b16 %v1070, %v1062
    %v1519 = vpack.c.b16 %v1071, %v1063
    %v1520 = vpack.c.b16 %v1080, %v1072
    %v1521 = vpack.c.b16 %v1081, %v1073
    %v1522 = vpack.c.b16 %v1082, %v1074
    %v1523 = vpack.c.b16 %v1083, %v1075
    %v1524 = vpack.c.b16 %v1084, %v1076
    %v1525 = vpack.c.b16 %v1085, %v1077
    %v1526 = vpack.c.b16 %v1086, %v1078
    %v1527 = vpack.c.b16 %v1087, %v1079
    %v1528 = vpack.c.b16 %v1096, %v1088
    %v1529 = vpack.c.b16 %v1097, %v1089
    %v1530 = vpack.c.b16 %v1098, %v1090
    %v1531 = vpack.c.b16 %v1099, %v1091
    %v1532 = vpack.c.b16 %v1100, %v1092
    %v1533 = vpack.c.b16 %v1101, %v1093
    %v1534 = vpack.c.b16 %v1102, %v1094
    %v1535 = vpack.c.b16 %v1103, %v1095
    %v1536 = vpack.c.b16 %v1112, %v1104
    %v1537 = vpack.c.b16 %v1113, %v1105
    %v1538 = vpack.c.b16 %v1114, %v1106
    %v1539 = vpack.c.b16 %v1115, %v1107
    %v1540 = vpack.c.b16 %v1116, %v1108
    %v1541 = vpack.c.b16 %v1117, %v1109
    %v1542 = vpack.c.b16 %v1118, %v1110
    %v1543 = vpack.c.b16 %v1119, %v1111
    %v1544 = vpack.c.b16 %v1128, %v1120
    %v1545 = vpack.c.b16 %v1129, %v1121
    %v1546 = vpack.c.b16 %v1130, %v1122
    %v1547 = vpack.c.b16 %v1131, %v1123
    %v1548 = vpack.c.b16 %v1132, %v1124
    %v1549 = vpack.c.b16 %v1133, %v1125
    %v1550 = vpack.c.b16 %v1134, %v1126
    %v1551 = vpack.c.b16 %v1135, %v1127
    %v1552 = vpack.c.b16 %v1144, %v1136
    %v1553 = vpack.c.b16 %v1145, %v1137
    %v1554 = vpack.c.b16 %v1146, %v1138
    %v1555 = vpack.c.b16 %v1147, %v1139
    %v1556 = vpack.c.b16 %v1148, %v1140
    %v1557 = vpack.c.b16 %v1149, %v1141
    %v1558 = vpack.c.b16 %v1150, %v1142
    %v1559 = vpack.c.b16 %v1151, %v1143
    %v1560 = vpack.c.b16 %v1160, %v1152
    %v1561 = vpack.c.b16 %v1161, %v1153
    %v1562 = vpack.c.b16 %v1162, %v1154
    %v1563 = vpack.c.b16 %v1163, %v1155
    %v1564 = vpack.c.b16 %v1164, %v1156
    %v1565 = vpack.c.b16 %v1165, %v1157
    %v1566 = vpack.c.b16 %v1166, %v1158
    %v1567 = vpack.c.b16 %v1167, %v1159
    %v1568 = vpack.c.b16 %v1176, %v1168
    %v1569 = vpack.c.b16 %v1177, %v1169
    %v1570 = vpack.c.b16 %v1178, %v1170
    %v1571 = vpack.c.b16 %v1179, %v1171
    %v1572 = vpack.c.b16 %v1180, %v1172
    %v1573 = vpack.c.b16 %v1181, %v1173
    %v1574 = vpack.c.b16 %v1182, %v1174
    %v1575 = vpack.c.b16 %v1183, %v1175
    %v1576 = vpack.c.b16 %v1192, %v1184
    %v1577 = vpack.c.b16 %v1193, %v1185
    %v1578 = vpack.c.b16 %v1194, %v1186
    %v1579 = vpack.c.b16 %v1195, %v1187
    %v1580 = vpack.c.b16 %v1196, %v1188
    %v1581 = vpack.c.b16 %v1197, %v1189
    %v1582 = vpack.c.b16 %v1198, %v1190
    %v1583 = vpack.c.b16 %v1199, %v1191
    %v1584 = vpack.c.b16 %v1208, %v1200
    %v1585 = vpack.c.b16 %v1209, %v1201
    %v1586 = vpack.c.b16 %v1210, %v1202
    %v1587 = vpack.c.b16 %v1211, %v1203
    %v1588 = vpack.c.b16 %v1212, %v1204
    %v1589 = vpack.c.b16 %v1213, %v1205
    %v1590 = vpack.c.b16 %v1214, %v1206
    %v1591 = vpack.c.b16 %v1215, %v1207
    %v1592 = vpack.c.b16 %v1224, %v1216
    %v1593 = vpack.c.b16 %v1225, %v1217
    %v1594 = vpack.c.b16 %v1226, %v1218
    %v1595 = vpack.c.b16 %v1227, %v1219
    %v1596 = vpack.c.b16 %v1228, %v1220
    %v1597 = vpack.c.b16 %v1229, %v1221
    %v1598 = vpack.c.b16 %v1230, %v1222
    %v1599 = vpack.c.b16 %v1231, %v1223
    %v1600 = vpack.c.b16 %v1240, %v1232
    %v1601 = vpack.c.b16 %v1241, %v1233
    %v1602 = vpack.c.b16 %v1242, %v1234
    %v1603 = vpack.c.b16 %v1243, %v1235
    %v1604 = vpack.c.b16 %v1244, %v1236
    %v1605 = vpack.c.b16 %v1245, %v1237
    %v1606 = vpack.c.b16 %v1246, %v1238
    %v1607 = vpack.c.b16 %v1247, %v1239
    %v1608 = vpack.c.b16 %v1256, %v1248
    %v1609 = vpack.c.b16 %v1257, %v1249
    %v1610 = vpack.c.b16 %v1258, %v1250
    %v1611 = vpack.c.b16 %v1259, %v1251
    %v1612 = vpack.c.b16 %v1260, %v1252
    %v1613 = vpack.c.b16 %v1261, %v1253
    %v1614 = vpack.c.b16 %v1262, %v1254
    %v1615 = vpack.c.b16 %v1263, %v1255
    %v1616 = vpack.c.b16 %v1272, %v1264
    %v1617 = vpack.c.b16 %v1273, %v1265
    %v1618 = vpack.c.b16 %v1274, %v1266
    %v1619 = vpack.c.b16 %v1275, %v1267
    %v1620 = vpack.c.b16 %v1276, %v1268
    %v1621 = vpack.c.b16 %v1277, %v1269
    %v1622 = vpack.c.b16 %v1278, %v1270
    %v1623 = vpack.c.b16 %v1279, %v1271
    %v1624 = vpack.c.b16 %v1288, %v1280
    %v1625 = vpack.c.b16 %v1289, %v1281
    %v1626 = vpack.c.b16 %v1290, %v1282
    %v1627 = vpack.c.b16 %v1291, %v1283
    %v1628 = vpack.c.b16 %v1292, %v1284
    %v1629 = vpack.c.b16 %v1293, %v1285
    %v1630 = vpack.c.b16 %v1294, %v1286
    %v1631 = vpack.c.b16 %v1295, %v1287
    %v1632 = vpack.c.b16 %v1304, %v1296
    %v1633 = vpack.c.b16 %v1305, %v1297
    %v1634 = vpack.c.b16 %v1306, %v1298
    %v1635 = vpack.c.b16 %v1307, %v1299
    %v1636 = vpack.c.b16 %v1308, %v1300
    %v1637 = vpack.c.b16 %v1309, %v1301
    %v1638 = vpack.c.b16 %v1310, %v1302
    %v1639 = vpack.c.b16 %v1311, %v1303
    %v1640 = vpack.c.b16 %v1320, %v1312
    %v1641 = vpack.c.b16 %v1321, %v1313
    %v1642 = vpack.c.b16 %v1322, %v1314
    %v1643 = vpack.c.b16 %v1323, %v1315
    %v1644 = vpack.c.b16 %v1324, %v1316
    %v1645 = vpack.c.b16 %v1325, %v1317
    %v1646 = vpack.c.b16 %v1326, %v1318
    %v1647 = vpack.c.b16 %v1327, %v1319
    %v1648 = vpack.c.b16 %v1336, %v1328
    %v1649 = vpack.c.b16 %v1337, %v1329
    %v1650 = vpack.c.b16 %v1338, %v1330
    %v1651 = vpack.c.b16 %v1339, %v1331
    %v1652 = vpack.c.b16 %v1340, %v1332
    %v1653 = vpack.c.b16 %v1341, %v1333
    %v1654 = vpack.c.b16 %v1342, %v1334
    %v1655 = vpack.c.b16 %v1343, %v1335
    %v1656 = vpack.c.b16 %v1352, %v1344
    %v1657 = vpack.c.b16 %v1353, %v1345
    %v1658 = vpack.c.b16 %v1354, %v1346
    %v1659 = vpack.c.b16 %v1355, %v1347
    %v1660 = vpack.c.b16 %v1356, %v1348
    %v1661 = vpack.c.b16 %v1357, %v1349
    %v1662 = vpack.c.b16 %v1358, %v1350
    %v1663 = vpack.c.b16 %v1359, %v1351
    %v1664 = vpack.c.b16 %v1368, %v1360
    %v1665 = vpack.c.b16 %v1369, %v1361
    %v1666 = vpack.c.b16 %v1370, %v1362
    %v1667 = vpack.c.b16 %v1371, %v1363
    %v1668 = vpack.c.b16 %v1372, %v1364
    %v1669 = vpack.c.b16 %v1373, %v1365
    %v1670 = vpack.c.b16 %v1374, %v1366
    %v1671 = vpack.c.b16 %v1375, %v1367
    %v1672 = vpack.c.b16 %v1384, %v1376
    %v1673 = vpack.c.b16 %v1385, %v1377
    %v1674 = vpack.c.b16 %v1386, %v1378
    %v1675 = vpack.c.b16 %v1387, %v1379
    %v1676 = vpack.c.b16 %v1388, %v1380
    %v1677 = vpack.c.b16 %v1389, %v1381
    %v1678 = vpack.c.b16 %v1390, %v1382
    %v1679 = vpack.c.b16 %v1391, %v1383
    %v1680 = vpack.c.b16 %v1400, %v1392
    %v1681 = vpack.c.b16 %v1401, %v1393
    %v1682 = vpack.c.b16 %v1402, %v1394
    %v1683 = vpack.c.b16 %v1403, %v1395
    %v1684 = vpack.c.b16 %v1404, %v1396
    %v1685 = vpack.c.b16 %v1405, %v1397
    %v1686 = vpack.c.b16 %v1406, %v1398
    %v1687 = vpack.c.b16 %v1407, %v1399
    %v1688 = vpack.c.b16 %v1416, %v1408
    %v1689 = vpack.c.b16 %v1417, %v1409
    %v1690 = vpack.c.b16 %v1418, %v1410
    %v1691 = vpack.c.b16 %v1419, %v1411
    %v1692 = vpack.c.b16 %v1420, %v1412
    %v1693 = vpack.c.b16 %v1421, %v1413
    %v1694 = vpack.c.b16 %v1422, %v1414
    %v1695 = vpack.c.b16 %v1423, %v1415
    %v1696 = vpack.c.b16 %v1432, %v1424
    %v1697 = vpack.c.b16 %v1433, %v1425
    %v1698 = vpack.c.b16 %v1434, %v1426
    %v1699 = vpack.c.b16 %v1435, %v1427
    %v1700 = vpack.c.b16 %v1436, %v1428
    %v1701 = vpack.c.b16 %v1437, %v1429
    %v1702 = vpack.c.b16 %v1438, %v1430
    %v1703 = vpack.c.b16 %v1439, %v1431
    %v1704 = vpack.c.b16 %v1448, %v1440
    %v1705 = vpack.c.b16 %v1449, %v1441
    %v1706 = vpack.c.b16 %v1450, %v1442
    %v1707 = vpack.c.b16 %v1451, %v1443
    %v1708 = vpack.c.b16 %v1452, %v1444
    %v1709 = vpack.c.b16 %v1453, %v1445
    %v1710 = vpack.c.b16 %v1454, %v1446
    %v1711 = vpack.c.b16 %v1455, %v1447
    %1968 = vmatpush.bf16.msra.mxu0 %v1512
    %1969 = vmatpush.bf16.msra.mxu0 %v1504
    %1970 = vmatpush.bf16.msra.mxu0 %v1496
    %1971 = vmatpush.bf16.msra.mxu0 %v1488
    %1972 = vmatpush.bf16.msra.mxu0 %v1480
    %1973 = vmatpush.bf16.msra.mxu0 %v1472
    %1974 = vmatpush.bf16.msra.mxu0 %v1464
    %1975 = vmatpush.bf16.msra.mxu0 %v1456
    %1976 = vmatmul.bf16.gmra.mxu0 %v410
    %v1977 = vpop.f32.mrf.mxu0
    %v1978 = vadd.f32 %v672, %v1977
    %v1979 = vpop.f32.mrf.mxu0
    %1980 = vdwg.mxu0
    %1981 = vmatpush.bf16.msra.mxu0 %v1576
    %1982 = vmatpush.bf16.msra.mxu0 %v1568
    %1983 = vmatpush.bf16.msra.mxu0 %v1560
    %1984 = vmatpush.bf16.msra.mxu0 %v1552
    %1985 = vmatpush.bf16.msra.mxu0 %v1544
    %1986 = vmatpush.bf16.msra.mxu0 %v1536
    %1987 = vmatpush.bf16.msra.mxu0 %v1528
    %1988 = vmatpush.bf16.msra.mxu0 %v1520
    %1989 = vmatmul.bf16.gmra.mxu0 %v411
    %v1990 = vpop.f32.mrf.mxu0
    %v1991 = vadd.f32 %v1978, %v1990
    %v1992 = vpop.f32.mrf.mxu0
    %1993 = vdwg.mxu0
    %1994 = vmatpush.bf16.msra.mxu0 %v1640
    %1995 = vmatpush.bf16.msra.mxu0 %v1632
    %1996 = vmatpush.bf16.msra.mxu0 %v1624
    %1997 = vmatpush.bf16.msra.mxu0 %v1616
    %1998 = vmatpush.bf16.msra.mxu0 %v1608
    %1999 = vmatpush.bf16.msra.mxu0 %v1600
    %2000 = vmatpush.bf16.msra.mxu0 %v1592
    %2001 = vmatpush.bf16.msra.mxu0 %v1584
    %2002 = vmatmul.bf16.gmra.mxu0 %v412
    %v2003 = vpop.f32.mrf.mxu0
    %v2004 = vadd.f32 %v1991, %v2003
    %v2005 = vpop.f32.mrf.mxu0
    %2006 = vdwg.mxu0
    %2007 = vmatpush.bf16.msra.mxu0 %v1704
    %2008 = vmatpush.bf16.msra.mxu0 %v1696
    %2009 = vmatpush.bf16.msra.mxu0 %v1688
    %2010 = vmatpush.bf16.msra.mxu0 %v1680
    %2011 = vmatpush.bf16.msra.mxu0 %v1672
    %2012 = vmatpush.bf16.msra.mxu0 %v1664
    %2013 = vmatpush.bf16.msra.mxu0 %v1656
    %2014 = vmatpush.bf16.msra.mxu0 %v1648
    %2015 = vmatmul.bf16.gmra.mxu0 %v413
    %v2016 = vpop.f32.mrf.mxu0
    %v2017 = vadd.f32 %v2004, %v2016
    %v2018 = vpop.f32.mrf.mxu0
    %2019 = vdwg.mxu0
    %2020 = vmatpush.bf16.msra.mxu0 %v1513
    %2021 = vmatpush.bf16.msra.mxu0 %v1505
    %2022 = vmatpush.bf16.msra.mxu0 %v1497
    %2023 = vmatpush.bf16.msra.mxu0 %v1489
    %2024 = vmatpush.bf16.msra.mxu0 %v1481
    %2025 = vmatpush.bf16.msra.mxu0 %v1473
    %2026 = vmatpush.bf16.msra.mxu0 %v1465
    %2027 = vmatpush.bf16.msra.mxu0 %v1457
    %2028 = vmatmul.bf16.gmra.mxu0 %v410
    %v2029 = vpop.f32.mrf.mxu0
    %v2030 = vadd.f32 %v673, %v2029
    %v2031 = vpop.f32.mrf.mxu0
    %2032 = vdwg.mxu0
    %2033 = vmatpush.bf16.msra.mxu0 %v1577
    %2034 = vmatpush.bf16.msra.mxu0 %v1569
    %2035 = vmatpush.bf16.msra.mxu0 %v1561
    %2036 = vmatpush.bf16.msra.mxu0 %v1553
    %2037 = vmatpush.bf16.msra.mxu0 %v1545
    %2038 = vmatpush.bf16.msra.mxu0 %v1537
    %2039 = vmatpush.bf16.msra.mxu0 %v1529
    %2040 = vmatpush.bf16.msra.mxu0 %v1521
    %2041 = vmatmul.bf16.gmra.mxu0 %v411
    %v2042 = vpop.f32.mrf.mxu0
    %v2043 = vadd.f32 %v2030, %v2042
    %v2044 = vpop.f32.mrf.mxu0
    %2045 = vdwg.mxu0
    %2046 = vmatpush.bf16.msra.mxu0 %v1641
    %2047 = vmatpush.bf16.msra.mxu0 %v1633
    %2048 = vmatpush.bf16.msra.mxu0 %v1625
    %2049 = vmatpush.bf16.msra.mxu0 %v1617
    %2050 = vmatpush.bf16.msra.mxu0 %v1609
    %2051 = vmatpush.bf16.msra.mxu0 %v1601
    %2052 = vmatpush.bf16.msra.mxu0 %v1593
    %2053 = vmatpush.bf16.msra.mxu0 %v1585
    %2054 = vmatmul.bf16.gmra.mxu0 %v412
    %v2055 = vpop.f32.mrf.mxu0
    %v2056 = vadd.f32 %v2043, %v2055
    %v2057 = vpop.f32.mrf.mxu0
    %2058 = vdwg.mxu0
    %2059 = vmatpush.bf16.msra.mxu0 %v1705
    %2060 = vmatpush.bf16.msra.mxu0 %v1697
    %2061 = vmatpush.bf16.msra.mxu0 %v1689
    %2062 = vmatpush.bf16.msra.mxu0 %v1681
    %2063 = vmatpush.bf16.msra.mxu0 %v1673
    %2064 = vmatpush.bf16.msra.mxu0 %v1665
    %2065 = vmatpush.bf16.msra.mxu0 %v1657
    %2066 = vmatpush.bf16.msra.mxu0 %v1649
    %2067 = vmatmul.bf16.gmra.mxu0 %v413
    %v2068 = vpop.f32.mrf.mxu0
    %v2069 = vadd.f32 %v2056, %v2068
    %v2070 = vpop.f32.mrf.mxu0
    %2071 = vdwg.mxu0
    %2072 = vmatpush.bf16.msra.mxu0 %v1514
    %2073 = vmatpush.bf16.msra.mxu0 %v1506
    %2074 = vmatpush.bf16.msra.mxu0 %v1498
    %2075 = vmatpush.bf16.msra.mxu0 %v1490
    %2076 = vmatpush.bf16.msra.mxu0 %v1482
    %2077 = vmatpush.bf16.msra.mxu0 %v1474
    %2078 = vmatpush.bf16.msra.mxu0 %v1466
    %2079 = vmatpush.bf16.msra.mxu0 %v1458
    %2080 = vmatmul.bf16.gmra.mxu0 %v410
    %v2081 = vpop.f32.mrf.mxu0
    %v2082 = vadd.f32 %v674, %v2081
    %v2083 = vpop.f32.mrf.mxu0
    %2084 = vdwg.mxu0
    %2085 = vmatpush.bf16.msra.mxu0 %v1578
    %2086 = vmatpush.bf16.msra.mxu0 %v1570
    %2087 = vmatpush.bf16.msra.mxu0 %v1562
    %2088 = vmatpush.bf16.msra.mxu0 %v1554
    %2089 = vmatpush.bf16.msra.mxu0 %v1546
    %2090 = vmatpush.bf16.msra.mxu0 %v1538
    %2091 = vmatpush.bf16.msra.mxu0 %v1530
    %2092 = vmatpush.bf16.msra.mxu0 %v1522
    %2093 = vmatmul.bf16.gmra.mxu0 %v411
    %v2094 = vpop.f32.mrf.mxu0
    %v2095 = vadd.f32 %v2082, %v2094
    %v2096 = vpop.f32.mrf.mxu0
    %2097 = vdwg.mxu0
    %2098 = vmatpush.bf16.msra.mxu0 %v1642
    %2099 = vmatpush.bf16.msra.mxu0 %v1634
    %2100 = vmatpush.bf16.msra.mxu0 %v1626
    %2101 = vmatpush.bf16.msra.mxu0 %v1618
    %2102 = vmatpush.bf16.msra.mxu0 %v1610
    %2103 = vmatpush.bf16.msra.mxu0 %v1602
    %2104 = vmatpush.bf16.msra.mxu0 %v1594
    %2105 = vmatpush.bf16.msra.mxu0 %v1586
    %2106 = vmatmul.bf16.gmra.mxu0 %v412
    %v2107 = vpop.f32.mrf.mxu0
    %v2108 = vadd.f32 %v2095, %v2107
    %v2109 = vpop.f32.mrf.mxu0
    %2110 = vdwg.mxu0
    %2111 = vmatpush.bf16.msra.mxu0 %v1706
    %2112 = vmatpush.bf16.msra.mxu0 %v1698
    %2113 = vmatpush.bf16.msra.mxu0 %v1690
    %2114 = vmatpush.bf16.msra.mxu0 %v1682
    %2115 = vmatpush.bf16.msra.mxu0 %v1674
    %2116 = vmatpush.bf16.msra.mxu0 %v1666
    %2117 = vmatpush.bf16.msra.mxu0 %v1658
    %2118 = vmatpush.bf16.msra.mxu0 %v1650
    %2119 = vmatmul.bf16.gmra.mxu0 %v413
    %v2120 = vpop.f32.mrf.mxu0
    %v2121 = vadd.f32 %v2108, %v2120
    %v2122 = vpop.f32.mrf.mxu0
    %2123 = vdwg.mxu0
    %2124 = vmatpush.bf16.msra.mxu0 %v1515
    %2125 = vmatpush.bf16.msra.mxu0 %v1507
    %2126 = vmatpush.bf16.msra.mxu0 %v1499
    %2127 = vmatpush.bf16.msra.mxu0 %v1491
    %2128 = vmatpush.bf16.msra.mxu0 %v1483
    %2129 = vmatpush.bf16.msra.mxu0 %v1475
    %2130 = vmatpush.bf16.msra.mxu0 %v1467
    %2131 = vmatpush.bf16.msra.mxu0 %v1459
    %2132 = vmatmul.bf16.gmra.mxu0 %v410
    %v2133 = vpop.f32.mrf.mxu0
    %v2134 = vadd.f32 %v675, %v2133
    %v2135 = vpop.f32.mrf.mxu0
    %2136 = vdwg.mxu0
    %2137 = vmatpush.bf16.msra.mxu0 %v1579
    %2138 = vmatpush.bf16.msra.mxu0 %v1571
    %2139 = vmatpush.bf16.msra.mxu0 %v1563
    %2140 = vmatpush.bf16.msra.mxu0 %v1555
    %2141 = vmatpush.bf16.msra.mxu0 %v1547
    %2142 = vmatpush.bf16.msra.mxu0 %v1539
    %2143 = vmatpush.bf16.msra.mxu0 %v1531
    %2144 = vmatpush.bf16.msra.mxu0 %v1523
    %2145 = vmatmul.bf16.gmra.mxu0 %v411
    %v2146 = vpop.f32.mrf.mxu0
    %v2147 = vadd.f32 %v2134, %v2146
    %v2148 = vpop.f32.mrf.mxu0
    %2149 = vdwg.mxu0
    %2150 = vmatpush.bf16.msra.mxu0 %v1643
    %2151 = vmatpush.bf16.msra.mxu0 %v1635
    %2152 = vmatpush.bf16.msra.mxu0 %v1627
    %2153 = vmatpush.bf16.msra.mxu0 %v1619
    %2154 = vmatpush.bf16.msra.mxu0 %v1611
    %2155 = vmatpush.bf16.msra.mxu0 %v1603
    %2156 = vmatpush.bf16.msra.mxu0 %v1595
    %2157 = vmatpush.bf16.msra.mxu0 %v1587
    %2158 = vmatmul.bf16.gmra.mxu0 %v412
    %v2159 = vpop.f32.mrf.mxu0
    %v2160 = vadd.f32 %v2147, %v2159
    %v2161 = vpop.f32.mrf.mxu0
    %2162 = vdwg.mxu0
    %2163 = vmatpush.bf16.msra.mxu0 %v1707
    %2164 = vmatpush.bf16.msra.mxu0 %v1699
    %2165 = vmatpush.bf16.msra.mxu0 %v1691
    %2166 = vmatpush.bf16.msra.mxu0 %v1683
    %2167 = vmatpush.bf16.msra.mxu0 %v1675
    %2168 = vmatpush.bf16.msra.mxu0 %v1667
    %2169 = vmatpush.bf16.msra.mxu0 %v1659
    %2170 = vmatpush.bf16.msra.mxu0 %v1651
    %2171 = vmatmul.bf16.gmra.mxu0 %v413
    %v2172 = vpop.f32.mrf.mxu0
    %v2173 = vadd.f32 %v2160, %v2172
    %v2174 = vpop.f32.mrf.mxu0
    %2175 = vdwg.mxu0
    %2176 = vmatpush.bf16.msra.mxu0 %v1516
    %2177 = vmatpush.bf16.msra.mxu0 %v1508
    %2178 = vmatpush.bf16.msra.mxu0 %v1500
    %2179 = vmatpush.bf16.msra.mxu0 %v1492
    %2180 = vmatpush.bf16.msra.mxu0 %v1484
    %2181 = vmatpush.bf16.msra.mxu0 %v1476
    %2182 = vmatpush.bf16.msra.mxu0 %v1468
    %2183 = vmatpush.bf16.msra.mxu0 %v1460
    %2184 = vmatmul.bf16.gmra.mxu0 %v410
    %v2185 = vpop.f32.mrf.mxu0
    %v2186 = vadd.f32 %v676, %v2185
    %v2187 = vpop.f32.mrf.mxu0
    %2188 = vdwg.mxu0
    %2189 = vmatpush.bf16.msra.mxu0 %v1580
    %2190 = vmatpush.bf16.msra.mxu0 %v1572
    %2191 = vmatpush.bf16.msra.mxu0 %v1564
    %2192 = vmatpush.bf16.msra.mxu0 %v1556
    %2193 = vmatpush.bf16.msra.mxu0 %v1548
    %2194 = vmatpush.bf16.msra.mxu0 %v1540
    %2195 = vmatpush.bf16.msra.mxu0 %v1532
    %2196 = vmatpush.bf16.msra.mxu0 %v1524
    %2197 = vmatmul.bf16.gmra.mxu0 %v411
    %v2198 = vpop.f32.mrf.mxu0
    %v2199 = vadd.f32 %v2186, %v2198
    %v2200 = vpop.f32.mrf.mxu0
    %2201 = vdwg.mxu0
    %2202 = vmatpush.bf16.msra.mxu0 %v1644
    %2203 = vmatpush.bf16.msra.mxu0 %v1636
    %2204 = vmatpush.bf16.msra.mxu0 %v1628
    %2205 = vmatpush.bf16.msra.mxu0 %v1620
    %2206 = vmatpush.bf16.msra.mxu0 %v1612
    %2207 = vmatpush.bf16.msra.mxu0 %v1604
    %2208 = vmatpush.bf16.msra.mxu0 %v1596
    %2209 = vmatpush.bf16.msra.mxu0 %v1588
    %2210 = vmatmul.bf16.gmra.mxu0 %v412
    %v2211 = vpop.f32.mrf.mxu0
    %v2212 = vadd.f32 %v2199, %v2211
    %v2213 = vpop.f32.mrf.mxu0
    %2214 = vdwg.mxu0
    %2215 = vmatpush.bf16.msra.mxu0 %v1708
    %2216 = vmatpush.bf16.msra.mxu0 %v1700
    %2217 = vmatpush.bf16.msra.mxu0 %v1692
    %2218 = vmatpush.bf16.msra.mxu0 %v1684
    %2219 = vmatpush.bf16.msra.mxu0 %v1676
    %2220 = vmatpush.bf16.msra.mxu0 %v1668
    %2221 = vmatpush.bf16.msra.mxu0 %v1660
    %2222 = vmatpush.bf16.msra.mxu0 %v1652
    %2223 = vmatmul.bf16.gmra.mxu0 %v413
    %v2224 = vpop.f32.mrf.mxu0
    %v2225 = vadd.f32 %v2212, %v2224
    %v2226 = vpop.f32.mrf.mxu0
    %2227 = vdwg.mxu0
    %2228 = vmatpush.bf16.msra.mxu0 %v1517
    %2229 = vmatpush.bf16.msra.mxu0 %v1509
    %2230 = vmatpush.bf16.msra.mxu0 %v1501
    %2231 = vmatpush.bf16.msra.mxu0 %v1493
    %2232 = vmatpush.bf16.msra.mxu0 %v1485
    %2233 = vmatpush.bf16.msra.mxu0 %v1477
    %2234 = vmatpush.bf16.msra.mxu0 %v1469
    %2235 = vmatpush.bf16.msra.mxu0 %v1461
    %2236 = vmatmul.bf16.gmra.mxu0 %v410
    %v2237 = vpop.f32.mrf.mxu0
    %v2238 = vadd.f32 %v677, %v2237
    %v2239 = vpop.f32.mrf.mxu0
    %2240 = vdwg.mxu0
    %2241 = vmatpush.bf16.msra.mxu0 %v1581
    %2242 = vmatpush.bf16.msra.mxu0 %v1573
    %2243 = vmatpush.bf16.msra.mxu0 %v1565
    %2244 = vmatpush.bf16.msra.mxu0 %v1557
    %2245 = vmatpush.bf16.msra.mxu0 %v1549
    %2246 = vmatpush.bf16.msra.mxu0 %v1541
    %2247 = vmatpush.bf16.msra.mxu0 %v1533
    %2248 = vmatpush.bf16.msra.mxu0 %v1525
    %2249 = vmatmul.bf16.gmra.mxu0 %v411
    %v2250 = vpop.f32.mrf.mxu0
    %v2251 = vadd.f32 %v2238, %v2250
    %v2252 = vpop.f32.mrf.mxu0
    %2253 = vdwg.mxu0
    %2254 = vmatpush.bf16.msra.mxu0 %v1645
    %2255 = vmatpush.bf16.msra.mxu0 %v1637
    %2256 = vmatpush.bf16.msra.mxu0 %v1629
    %2257 = vmatpush.bf16.msra.mxu0 %v1621
    %2258 = vmatpush.bf16.msra.mxu0 %v1613
    %2259 = vmatpush.bf16.msra.mxu0 %v1605
    %2260 = vmatpush.bf16.msra.mxu0 %v1597
    %2261 = vmatpush.bf16.msra.mxu0 %v1589
    %2262 = vmatmul.bf16.gmra.mxu0 %v412
    %v2263 = vpop.f32.mrf.mxu0
    %v2264 = vadd.f32 %v2251, %v2263
    %v2265 = vpop.f32.mrf.mxu0
    %2266 = vdwg.mxu0
    %2267 = vmatpush.bf16.msra.mxu0 %v1709
    %2268 = vmatpush.bf16.msra.mxu0 %v1701
    %2269 = vmatpush.bf16.msra.mxu0 %v1693
    %2270 = vmatpush.bf16.msra.mxu0 %v1685
    %2271 = vmatpush.bf16.msra.mxu0 %v1677
    %2272 = vmatpush.bf16.msra.mxu0 %v1669
    %2273 = vmatpush.bf16.msra.mxu0 %v1661
    %2274 = vmatpush.bf16.msra.mxu0 %v1653
    %2275 = vmatmul.bf16.gmra.mxu0 %v413
    %v2276 = vpop.f32.mrf.mxu0
    %v2277 = vadd.f32 %v2264, %v2276
    %v2278 = vpop.f32.mrf.mxu0
    %2279 = vdwg.mxu0
    %2280 = vmatpush.bf16.msra.mxu0 %v1518
    %2281 = vmatpush.bf16.msra.mxu0 %v1510
    %2282 = vmatpush.bf16.msra.mxu0 %v1502
    %2283 = vmatpush.bf16.msra.mxu0 %v1494
    %2284 = vmatpush.bf16.msra.mxu0 %v1486
    %2285 = vmatpush.bf16.msra.mxu0 %v1478
    %2286 = vmatpush.bf16.msra.mxu0 %v1470
    %2287 = vmatpush.bf16.msra.mxu0 %v1462
    %2288 = vmatmul.bf16.gmra.mxu0 %v410
    %v2289 = vpop.f32.mrf.mxu0
    %v2290 = vadd.f32 %v678, %v2289
    %v2291 = vpop.f32.mrf.mxu0
    %2292 = vdwg.mxu0
    %2293 = vmatpush.bf16.msra.mxu0 %v1582
    %2294 = vmatpush.bf16.msra.mxu0 %v1574
    %2295 = vmatpush.bf16.msra.mxu0 %v1566
    %2296 = vmatpush.bf16.msra.mxu0 %v1558
    %2297 = vmatpush.bf16.msra.mxu0 %v1550
    %2298 = vmatpush.bf16.msra.mxu0 %v1542
    %2299 = vmatpush.bf16.msra.mxu0 %v1534
    %2300 = vmatpush.bf16.msra.mxu0 %v1526
    %2301 = vmatmul.bf16.gmra.mxu0 %v411
    %v2302 = vpop.f32.mrf.mxu0
    %v2303 = vadd.f32 %v2290, %v2302
    %v2304 = vpop.f32.mrf.mxu0
    %2305 = vdwg.mxu0
    %2306 = vmatpush.bf16.msra.mxu0 %v1646
    %2307 = vmatpush.bf16.msra.mxu0 %v1638
    %2308 = vmatpush.bf16.msra.mxu0 %v1630
    %2309 = vmatpush.bf16.msra.mxu0 %v1622
    %2310 = vmatpush.bf16.msra.mxu0 %v1614
    %2311 = vmatpush.bf16.msra.mxu0 %v1606
    %2312 = vmatpush.bf16.msra.mxu0 %v1598
    %2313 = vmatpush.bf16.msra.mxu0 %v1590
    %2314 = vmatmul.bf16.gmra.mxu0 %v412
    %v2315 = vpop.f32.mrf.mxu0
    %v2316 = vadd.f32 %v2303, %v2315
    %v2317 = vpop.f32.mrf.mxu0
    %2318 = vdwg.mxu0
    %2319 = vmatpush.bf16.msra.mxu0 %v1710
    %2320 = vmatpush.bf16.msra.mxu0 %v1702
    %2321 = vmatpush.bf16.msra.mxu0 %v1694
    %2322 = vmatpush.bf16.msra.mxu0 %v1686
    %2323 = vmatpush.bf16.msra.mxu0 %v1678
    %2324 = vmatpush.bf16.msra.mxu0 %v1670
    %2325 = vmatpush.bf16.msra.mxu0 %v1662
    %2326 = vmatpush.bf16.msra.mxu0 %v1654
    %2327 = vmatmul.bf16.gmra.mxu0 %v413
    %v2328 = vpop.f32.mrf.mxu0
    %v2329 = vadd.f32 %v2316, %v2328
    %v2330 = vpop.f32.mrf.mxu0
    %2331 = vdwg.mxu0
    %2332 = vmatpush.bf16.msra.mxu0 %v1519
    %2333 = vmatpush.bf16.msra.mxu0 %v1511
    %2334 = vmatpush.bf16.msra.mxu0 %v1503
    %2335 = vmatpush.bf16.msra.mxu0 %v1495
    %2336 = vmatpush.bf16.msra.mxu0 %v1487
    %2337 = vmatpush.bf16.msra.mxu0 %v1479
    %2338 = vmatpush.bf16.msra.mxu0 %v1471
    %2339 = vmatpush.bf16.msra.mxu0 %v1463
    %2340 = vmatmul.bf16.gmra.mxu0 %v410
    %v2341 = vpop.f32.mrf.mxu0
    %v2342 = vadd.f32 %v679, %v2341
    %v2343 = vpop.f32.mrf.mxu0
    %2344 = vdwg.mxu0
    %2345 = vmatpush.bf16.msra.mxu0 %v1583
    %2346 = vmatpush.bf16.msra.mxu0 %v1575
    %2347 = vmatpush.bf16.msra.mxu0 %v1567
    %2348 = vmatpush.bf16.msra.mxu0 %v1559
    %2349 = vmatpush.bf16.msra.mxu0 %v1551
    %2350 = vmatpush.bf16.msra.mxu0 %v1543
    %2351 = vmatpush.bf16.msra.mxu0 %v1535
    %2352 = vmatpush.bf16.msra.mxu0 %v1527
    %2353 = vmatmul.bf16.gmra.mxu0 %v411
    %v2354 = vpop.f32.mrf.mxu0
    %v2355 = vadd.f32 %v2342, %v2354
    %v2356 = vpop.f32.mrf.mxu0
    %2357 = vdwg.mxu0
    %2358 = vmatpush.bf16.msra.mxu0 %v1647
    %2359 = vmatpush.bf16.msra.mxu0 %v1639
    %2360 = vmatpush.bf16.msra.mxu0 %v1631
    %2361 = vmatpush.bf16.msra.mxu0 %v1623
    %2362 = vmatpush.bf16.msra.mxu0 %v1615
    %2363 = vmatpush.bf16.msra.mxu0 %v1607
    %2364 = vmatpush.bf16.msra.mxu0 %v1599
    %2365 = vmatpush.bf16.msra.mxu0 %v1591
    %2366 = vmatmul.bf16.gmra.mxu0 %v412
    %v2367 = vpop.f32.mrf.mxu0
    %v2368 = vadd.f32 %v2355, %v2367
    %v2369 = vpop.f32.mrf.mxu0
    %2370 = vdwg.mxu0
    %2371 = vmatpush.bf16.msra.mxu0 %v1711
    %2372 = vmatpush.bf16.msra.mxu0 %v1703
    %2373 = vmatpush.bf16.msra.mxu0 %v1695
    %2374 = vmatpush.bf16.msra.mxu0 %v1687
    %2375 = vmatpush.bf16.msra.mxu0 %v1679
    %2376 = vmatpush.bf16.msra.mxu0 %v1671
    %2377 = vmatpush.bf16.msra.mxu0 %v1663
    %2378 = vmatpush.bf16.msra.mxu0 %v1655
    %2379 = vmatmul.bf16.gmra.mxu0 %v413
    %v2380 = vpop.f32.mrf.mxu0
    %v2381 = vadd.f32 %v2368, %v2380
    %v2382 = vpop.f32.mrf.mxu0
    %2383 = vdwg.mxu0
    %v2384 = vmax.f32 %v2017, 0.0
    %v2385 = vmax.f32 %v2069, 0.0
    %v2386 = vmax.f32 %v2121, 0.0
    %v2387 = vmax.f32 %v2173, 0.0
    %v2388 = vmax.f32 %v2225, 0.0
    %v2389 = vmax.f32 %v2277, 0.0
    %v2390 = vmax.f32 %v2329, 0.0
    %v2391 = vmax.f32 %v2381, 0.0
    %v2392 = vpack.c.bf16 %v2384, %v2384
    %v2393 = vpack.c.bf16 %v2385, %v2385
    %v2394 = vpack.c.bf16 %v2386, %v2386
    %v2395 = vpack.c.bf16 %v2387, %v2387
    %v2396 = vpack.c.bf16 %v2388, %v2388
    %v2397 = vpack.c.bf16 %v2389, %v2389
    %v2398 = vpack.c.bf16 %v2390, %v2390
    %v2399 = vpack.c.bf16 %v2391, %v2391
    %v2400 = vld [vmem:[%s9] sm:$0xff]
    %v2401 = vld [vmem:[%s9 + $0x8] sm:$0xff]
    %v2402 = vld [vmem:[%s9 + $0x10] sm:$0xff]
    %v2403 = vld [vmem:[%s9 + $0x18] sm:$0xff]
    %v2404 = vld [vmem:[%s9 + $0x20] sm:$0xff]
    %v2405 = vld [vmem:[%s9 + $0x28] sm:$0xff]
    %v2406 = vld [vmem:[%s9 + $0x30] sm:$0xff]
    %v2407 = vld [vmem:[%s9 + $0x38] sm:$0xff]
    %v2408 = vld [vmem:[%s9 + $0x40] sm:$0xff]
    %v2409 = vld [vmem:[%s9 + $0x48] sm:$0xff]
    %v2410 = vld [vmem:[%s9 + $0x50] sm:$0xff]
    %v2411 = vld [vmem:[%s9 + $0x58] sm:$0xff]
    %v2412 = vld [vmem:[%s9 + $0x60] sm:$0xff]
    %v2413 = vld [vmem:[%s9 + $0x68] sm:$0xff]
    %v2414 = vld [vmem:[%s9 + $0x70] sm:$0xff]
    %v2415 = vld [vmem:[%s9 + $0x78] sm:$0xff]
    %v2416 = vld [vmem:[%s9 + $0x80] sm:$0xff]
    %v2417 = vld [vmem:[%s9 + $0x88] sm:$0xff]
    %v2418 = vld [vmem:[%s9 + $0x90] sm:$0xff]
    %v2419 = vld [vmem:[%s9 + $0x98] sm:$0xff]
    %v2420 = vld [vmem:[%s9 + $0xa0] sm:$0xff]
    %v2421 = vld [vmem:[%s9 + $0xa8] sm:$0xff]
    %v2422 = vld [vmem:[%s9 + $0xb0] sm:$0xff]
    %v2423 = vld [vmem:[%s9 + $0xb8] sm:$0xff]
    %v2424 = vld [vmem:[%s9 + $0xc0] sm:$0xff]
    %v2425 = vld [vmem:[%s9 + $0xc8] sm:$0xff]
    %v2426 = vld [vmem:[%s9 + $0xd0] sm:$0xff]
    %v2427 = vld [vmem:[%s9 + $0xd8] sm:$0xff]
    %v2428 = vld [vmem:[%s9 + $0xe0] sm:$0xff]
    %v2429 = vld [vmem:[%s9 + $0xe8] sm:$0xff]
    %v2430 = vld [vmem:[%s9 + $0xf0] sm:$0xff]
    %v2431 = vld [vmem:[%s9 + $0xf8] sm:$0xff]
    %v2432 = vld [vmem:[%s9 + $0x100] sm:$0xff]
    %v2433 = vld [vmem:[%s9 + $0x108] sm:$0xff]
    %v2434 = vld [vmem:[%s9 + $0x110] sm:$0xff]
    %v2435 = vld [vmem:[%s9 + $0x118] sm:$0xff]
    %v2436 = vld [vmem:[%s9 + $0x120] sm:$0xff]
    %v2437 = vld [vmem:[%s9 + $0x128] sm:$0xff]
    %v2438 = vld [vmem:[%s9 + $0x130] sm:$0xff]
    %v2439 = vld [vmem:[%s9 + $0x138] sm:$0xff]
    %v2440 = vld [vmem:[%s9 + $0x140] sm:$0xff]
    %v2441 = vld [vmem:[%s9 + $0x148] sm:$0xff]
    %v2442 = vld [vmem:[%s9 + $0x150] sm:$0xff]
    %v2443 = vld [vmem:[%s9 + $0x158] sm:$0xff]
    %v2444 = vld [vmem:[%s9 + $0x160] sm:$0xff]
    %v2445 = vld [vmem:[%s9 + $0x168] sm:$0xff]
    %v2446 = vld [vmem:[%s9 + $0x170] sm:$0xff]
    %v2447 = vld [vmem:[%s9 + $0x178] sm:$0xff]
    %v2448 = vld [vmem:[%s9 + $0x180] sm:$0xff]
    %v2449 = vld [vmem:[%s9 + $0x188] sm:$0xff]
    %v2450 = vld [vmem:[%s9 + $0x190] sm:$0xff]
    %v2451 = vld [vmem:[%s9 + $0x198] sm:$0xff]
    %v2452 = vld [vmem:[%s9 + $0x1a0] sm:$0xff]
    %v2453 = vld [vmem:[%s9 + $0x1a8] sm:$0xff]
    %v2454 = vld [vmem:[%s9 + $0x1b0] sm:$0xff]
    %v2455 = vld [vmem:[%s9 + $0x1b8] sm:$0xff]
    %v2456 = vld [vmem:[%s9 + $0x1c0] sm:$0xff]
    %v2457 = vld [vmem:[%s9 + $0x1c8] sm:$0xff]
    %v2458 = vld [vmem:[%s9 + $0x1d0] sm:$0xff]
    %v2459 = vld [vmem:[%s9 + $0x1d8] sm:$0xff]
    %v2460 = vld [vmem:[%s9 + $0x1e0] sm:$0xff]
    %v2461 = vld [vmem:[%s9 + $0x1e8] sm:$0xff]
    %v2462 = vld [vmem:[%s9 + $0x1f0] sm:$0xff]
    %v2463 = vld [vmem:[%s9 + $0x1f8] sm:$0xff]
    %v2464 = vld [vmem:[%s9 + $0x200] sm:$0xff]
    %v2465 = vld [vmem:[%s9 + $0x208] sm:$0xff]
    %v2466 = vld [vmem:[%s9 + $0x210] sm:$0xff]
    %v2467 = vld [vmem:[%s9 + $0x218] sm:$0xff]
    %v2468 = vld [vmem:[%s9 + $0x220] sm:$0xff]
    %v2469 = vld [vmem:[%s9 + $0x228] sm:$0xff]
    %v2470 = vld [vmem:[%s9 + $0x230] sm:$0xff]
    %v2471 = vld [vmem:[%s9 + $0x238] sm:$0xff]
    %v2472 = vld [vmem:[%s9 + $0x240] sm:$0xff]
    %v2473 = vld [vmem:[%s9 + $0x248] sm:$0xff]
    %v2474 = vld [vmem:[%s9 + $0x250] sm:$0xff]
    %v2475 = vld [vmem:[%s9 + $0x258] sm:$0xff]
    %v2476 = vld [vmem:[%s9 + $0x260] sm:$0xff]
    %v2477 = vld [vmem:[%s9 + $0x268] sm:$0xff]
    %v2478 = vld [vmem:[%s9 + $0x270] sm:$0xff]
    %v2479 = vld [vmem:[%s9 + $0x278] sm:$0xff]
    %v2480 = vld [vmem:[%s9 + $0x280] sm:$0xff]
    %v2481 = vld [vmem:[%s9 + $0x288] sm:$0xff]
    %v2482 = vld [vmem:[%s9 + $0x290] sm:$0xff]
    %v2483 = vld [vmem:[%s9 + $0x298] sm:$0xff]
    %v2484 = vld [vmem:[%s9 + $0x2a0] sm:$0xff]
    %v2485 = vld [vmem:[%s9 + $0x2a8] sm:$0xff]
    %v2486 = vld [vmem:[%s9 + $0x2b0] sm:$0xff]
    %v2487 = vld [vmem:[%s9 + $0x2b8] sm:$0xff]
    %v2488 = vld [vmem:[%s9 + $0x2c0] sm:$0xff]
    %v2489 = vld [vmem:[%s9 + $0x2c8] sm:$0xff]
    %v2490 = vld [vmem:[%s9 + $0x2d0] sm:$0xff]
    %v2491 = vld [vmem:[%s9 + $0x2d8] sm:$0xff]
    %v2492 = vld [vmem:[%s9 + $0x2e0] sm:$0xff]
    %v2493 = vld [vmem:[%s9 + $0x2e8] sm:$0xff]
    %v2494 = vld [vmem:[%s9 + $0x2f0] sm:$0xff]
    %v2495 = vld [vmem:[%s9 + $0x2f8] sm:$0xff]
    %v2496 = vld [vmem:[%s9 + $0x300] sm:$0xff]
    %v2497 = vld [vmem:[%s9 + $0x308] sm:$0xff]
    %v2498 = vld [vmem:[%s9 + $0x310] sm:$0xff]
    %v2499 = vld [vmem:[%s9 + $0x318] sm:$0xff]
    %v2500 = vld [vmem:[%s9 + $0x320] sm:$0xff]
    %v2501 = vld [vmem:[%s9 + $0x328] sm:$0xff]
    %v2502 = vld [vmem:[%s9 + $0x330] sm:$0xff]
    %v2503 = vld [vmem:[%s9 + $0x338] sm:$0xff]
    %v2504 = vld [vmem:[%s9 + $0x340] sm:$0xff]
    %v2505 = vld [vmem:[%s9 + $0x348] sm:$0xff]
    %v2506 = vld [vmem:[%s9 + $0x350] sm:$0xff]
    %v2507 = vld [vmem:[%s9 + $0x358] sm:$0xff]
    %v2508 = vld [vmem:[%s9 + $0x360] sm:$0xff]
    %v2509 = vld [vmem:[%s9 + $0x368] sm:$0xff]
    %v2510 = vld [vmem:[%s9 + $0x370] sm:$0xff]
    %v2511 = vld [vmem:[%s9 + $0x378] sm:$0xff]
    %v2512 = vld [vmem:[%s9 + $0x380] sm:$0xff]
    %v2513 = vld [vmem:[%s9 + $0x388] sm:$0xff]
    %v2514 = vld [vmem:[%s9 + $0x390] sm:$0xff]
    %v2515 = vld [vmem:[%s9 + $0x398] sm:$0xff]
    %v2516 = vld [vmem:[%s9 + $0x3a0] sm:$0xff]
    %v2517 = vld [vmem:[%s9 + $0x3a8] sm:$0xff]
    %v2518 = vld [vmem:[%s9 + $0x3b0] sm:$0xff]
    %v2519 = vld [vmem:[%s9 + $0x3b8] sm:$0xff]
    %v2520 = vld [vmem:[%s9 + $0x3c0] sm:$0xff]
    %v2521 = vld [vmem:[%s9 + $0x3c8] sm:$0xff]
    %v2522 = vld [vmem:[%s9 + $0x3d0] sm:$0xff]
    %v2523 = vld [vmem:[%s9 + $0x3d8] sm:$0xff]
    %v2524 = vld [vmem:[%s9 + $0x3e0] sm:$0xff]
    %v2525 = vld [vmem:[%s9 + $0x3e8] sm:$0xff]
    %v2526 = vld [vmem:[%s9 + $0x3f0] sm:$0xff]
    %v2527 = vld [vmem:[%s9 + $0x3f8] sm:$0xff]
    %v2528 = vld [vmem:[%s10] sm:$0x3]
    %v2530 = vperm.slane %v2528, 0
    %v2531 = vperm.slane %v2528, 1
    %v2662 = vunpack.c.l.b16 %v2400
    %v2663 = vunpack.c.h.b16 %v2400
    %v2664 = vunpack.c.l.b16 %v2401
    %v2665 = vunpack.c.h.b16 %v2401
    %v2666 = vunpack.c.l.b16 %v2402
    %v2667 = vunpack.c.h.b16 %v2402
    %v2668 = vunpack.c.l.b16 %v2403
    %v2669 = vunpack.c.h.b16 %v2403
    %v2670 = vunpack.c.l.b16 %v2404
    %v2671 = vunpack.c.h.b16 %v2404
    %v2672 = vunpack.c.l.b16 %v2405
    %v2673 = vunpack.c.h.b16 %v2405
    %v2674 = vunpack.c.l.b16 %v2406
    %v2675 = vunpack.c.h.b16 %v2406
    %v2676 = vunpack.c.l.b16 %v2407
    %v2677 = vunpack.c.h.b16 %v2407
    %v2678 = vunpack.c.l.b16 %v2408
    %v2679 = vunpack.c.h.b16 %v2408
    %v2680 = vunpack.c.l.b16 %v2409
    %v2681 = vunpack.c.h.b16 %v2409
    %v2682 = vunpack.c.l.b16 %v2410
    %v2683 = vunpack.c.h.b16 %v2410
    %v2684 = vunpack.c.l.b16 %v2411
    %v2685 = vunpack.c.h.b16 %v2411
    %v2686 = vunpack.c.l.b16 %v2412
    %v2687 = vunpack.c.h.b16 %v2412
    %v2688 = vunpack.c.l.b16 %v2413
    %v2689 = vunpack.c.h.b16 %v2413
    %v2690 = vunpack.c.l.b16 %v2414
    %v2691 = vunpack.c.h.b16 %v2414
    %v2692 = vunpack.c.l.b16 %v2415
    %v2693 = vunpack.c.h.b16 %v2415
    %v2694 = vunpack.c.l.b16 %v2416
    %v2695 = vunpack.c.h.b16 %v2416
    %v2696 = vunpack.c.l.b16 %v2417
    %v2697 = vunpack.c.h.b16 %v2417
    %v2698 = vunpack.c.l.b16 %v2418
    %v2699 = vunpack.c.h.b16 %v2418
    %v2700 = vunpack.c.l.b16 %v2419
    %v2701 = vunpack.c.h.b16 %v2419
    %v2702 = vunpack.c.l.b16 %v2420
    %v2703 = vunpack.c.h.b16 %v2420
    %v2704 = vunpack.c.l.b16 %v2421
    %v2705 = vunpack.c.h.b16 %v2421
    %v2706 = vunpack.c.l.b16 %v2422
    %v2707 = vunpack.c.h.b16 %v2422
    %v2708 = vunpack.c.l.b16 %v2423
    %v2709 = vunpack.c.h.b16 %v2423
    %v2710 = vunpack.c.l.b16 %v2424
    %v2711 = vunpack.c.h.b16 %v2424
    %v2712 = vunpack.c.l.b16 %v2425
    %v2713 = vunpack.c.h.b16 %v2425
    %v2714 = vunpack.c.l.b16 %v2426
    %v2715 = vunpack.c.h.b16 %v2426
    %v2716 = vunpack.c.l.b16 %v2427
    %v2717 = vunpack.c.h.b16 %v2427
    %v2718 = vunpack.c.l.b16 %v2428
    %v2719 = vunpack.c.h.b16 %v2428
    %v2720 = vunpack.c.l.b16 %v2429
    %v2721 = vunpack.c.h.b16 %v2429
    %v2722 = vunpack.c.l.b16 %v2430
    %v2723 = vunpack.c.h.b16 %v2430
    %v2724 = vunpack.c.l.b16 %v2431
    %v2725 = vunpack.c.h.b16 %v2431
    %v2726 = vunpack.c.l.b16 %v2432
    %v2727 = vunpack.c.h.b16 %v2432
    %v2728 = vunpack.c.l.b16 %v2433
    %v2729 = vunpack.c.h.b16 %v2433
    %v2730 = vunpack.c.l.b16 %v2434
    %v2731 = vunpack.c.h.b16 %v2434
    %v2732 = vunpack.c.l.b16 %v2435
    %v2733 = vunpack.c.h.b16 %v2435
    %v2734 = vunpack.c.l.b16 %v2436
    %v2735 = vunpack.c.h.b16 %v2436
    %v2736 = vunpack.c.l.b16 %v2437
    %v2737 = vunpack.c.h.b16 %v2437
    %v2738 = vunpack.c.l.b16 %v2438
    %v2739 = vunpack.c.h.b16 %v2438
    %v2740 = vunpack.c.l.b16 %v2439
    %v2741 = vunpack.c.h.b16 %v2439
    %v2742 = vunpack.c.l.b16 %v2440
    %v2743 = vunpack.c.h.b16 %v2440
    %v2744 = vunpack.c.l.b16 %v2441
    %v2745 = vunpack.c.h.b16 %v2441
    %v2746 = vunpack.c.l.b16 %v2442
    %v2747 = vunpack.c.h.b16 %v2442
    %v2748 = vunpack.c.l.b16 %v2443
    %v2749 = vunpack.c.h.b16 %v2443
    %v2750 = vunpack.c.l.b16 %v2444
    %v2751 = vunpack.c.h.b16 %v2444
    %v2752 = vunpack.c.l.b16 %v2445
    %v2753 = vunpack.c.h.b16 %v2445
    %v2754 = vunpack.c.l.b16 %v2446
    %v2755 = vunpack.c.h.b16 %v2446
    %v2756 = vunpack.c.l.b16 %v2447
    %v2757 = vunpack.c.h.b16 %v2447
    %v2758 = vunpack.c.l.b16 %v2448
    %v2759 = vunpack.c.h.b16 %v2448
    %v2760 = vunpack.c.l.b16 %v2449
    %v2761 = vunpack.c.h.b16 %v2449
    %v2762 = vunpack.c.l.b16 %v2450
    %v2763 = vunpack.c.h.b16 %v2450
    %v2764 = vunpack.c.l.b16 %v2451
    %v2765 = vunpack.c.h.b16 %v2451
    %v2766 = vunpack.c.l.b16 %v2452
    %v2767 = vunpack.c.h.b16 %v2452
    %v2768 = vunpack.c.l.b16 %v2453
    %v2769 = vunpack.c.h.b16 %v2453
    %v2770 = vunpack.c.l.b16 %v2454
    %v2771 = vunpack.c.h.b16 %v2454
    %v2772 = vunpack.c.l.b16 %v2455
    %v2773 = vunpack.c.h.b16 %v2455
    %v2774 = vunpack.c.l.b16 %v2456
    %v2775 = vunpack.c.h.b16 %v2456
    %v2776 = vunpack.c.l.b16 %v2457
    %v2777 = vunpack.c.h.b16 %v2457
    %v2778 = vunpack.c.l.b16 %v2458
    %v2779 = vunpack.c.h.b16 %v2458
    %v2780 = vunpack.c.l.b16 %v2459
    %v2781 = vunpack.c.h.b16 %v2459
    %v2782 = vunpack.c.l.b16 %v2460
    %v2783 = vunpack.c.h.b16 %v2460
    %v2784 = vunpack.c.l.b16 %v2461
    %v2785 = vunpack.c.h.b16 %v2461
    %v2786 = vunpack.c.l.b16 %v2462
    %v2787 = vunpack.c.h.b16 %v2462
    %v2788 = vunpack.c.l.b16 %v2463
    %v2789 = vunpack.c.h.b16 %v2463
    %v2790 = vunpack.c.l.b16 %v2464
    %v2791 = vunpack.c.h.b16 %v2464
    %v2792 = vunpack.c.l.b16 %v2465
    %v2793 = vunpack.c.h.b16 %v2465
    %v2794 = vunpack.c.l.b16 %v2466
    %v2795 = vunpack.c.h.b16 %v2466
    %v2796 = vunpack.c.l.b16 %v2467
    %v2797 = vunpack.c.h.b16 %v2467
    %v2798 = vunpack.c.l.b16 %v2468
    %v2799 = vunpack.c.h.b16 %v2468
    %v2800 = vunpack.c.l.b16 %v2469
    %v2801 = vunpack.c.h.b16 %v2469
    %v2802 = vunpack.c.l.b16 %v2470
    %v2803 = vunpack.c.h.b16 %v2470
    %v2804 = vunpack.c.l.b16 %v2471
    %v2805 = vunpack.c.h.b16 %v2471
    %v2806 = vunpack.c.l.b16 %v2472
    %v2807 = vunpack.c.h.b16 %v2472
    %v2808 = vunpack.c.l.b16 %v2473
    %v2809 = vunpack.c.h.b16 %v2473
    %v2810 = vunpack.c.l.b16 %v2474
    %v2811 = vunpack.c.h.b16 %v2474
    %v2812 = vunpack.c.l.b16 %v2475
    %v2813 = vunpack.c.h.b16 %v2475
    %v2814 = vunpack.c.l.b16 %v2476
    %v2815 = vunpack.c.h.b16 %v2476
    %v2816 = vunpack.c.l.b16 %v2477
    %v2817 = vunpack.c.h.b16 %v2477
    %v2818 = vunpack.c.l.b16 %v2478
    %v2819 = vunpack.c.h.b16 %v2478
    %v2820 = vunpack.c.l.b16 %v2479
    %v2821 = vunpack.c.h.b16 %v2479
    %v2822 = vunpack.c.l.b16 %v2480
    %v2823 = vunpack.c.h.b16 %v2480
    %v2824 = vunpack.c.l.b16 %v2481
    %v2825 = vunpack.c.h.b16 %v2481
    %v2826 = vunpack.c.l.b16 %v2482
    %v2827 = vunpack.c.h.b16 %v2482
    %v2828 = vunpack.c.l.b16 %v2483
    %v2829 = vunpack.c.h.b16 %v2483
    %v2830 = vunpack.c.l.b16 %v2484
    %v2831 = vunpack.c.h.b16 %v2484
    %v2832 = vunpack.c.l.b16 %v2485
    %v2833 = vunpack.c.h.b16 %v2485
    %v2834 = vunpack.c.l.b16 %v2486
    %v2835 = vunpack.c.h.b16 %v2486
    %v2836 = vunpack.c.l.b16 %v2487
    %v2837 = vunpack.c.h.b16 %v2487
    %v2838 = vunpack.c.l.b16 %v2488
    %v2839 = vunpack.c.h.b16 %v2488
    %v2840 = vunpack.c.l.b16 %v2489
    %v2841 = vunpack.c.h.b16 %v2489
    %v2842 = vunpack.c.l.b16 %v2490
    %v2843 = vunpack.c.h.b16 %v2490
    %v2844 = vunpack.c.l.b16 %v2491
    %v2845 = vunpack.c.h.b16 %v2491
    %v2846 = vunpack.c.l.b16 %v2492
    %v2847 = vunpack.c.h.b16 %v2492
    %v2848 = vunpack.c.l.b16 %v2493
    %v2849 = vunpack.c.h.b16 %v2493
    %v2850 = vunpack.c.l.b16 %v2494
    %v2851 = vunpack.c.h.b16 %v2494
    %v2852 = vunpack.c.l.b16 %v2495
    %v2853 = vunpack.c.h.b16 %v2495
    %v2854 = vunpack.c.l.b16 %v2496
    %v2855 = vunpack.c.h.b16 %v2496
    %v2856 = vunpack.c.l.b16 %v2497
    %v2857 = vunpack.c.h.b16 %v2497
    %v2858 = vunpack.c.l.b16 %v2498
    %v2859 = vunpack.c.h.b16 %v2498
    %v2860 = vunpack.c.l.b16 %v2499
    %v2861 = vunpack.c.h.b16 %v2499
    %v2862 = vunpack.c.l.b16 %v2500
    %v2863 = vunpack.c.h.b16 %v2500
    %v2864 = vunpack.c.l.b16 %v2501
    %v2865 = vunpack.c.h.b16 %v2501
    %v2866 = vunpack.c.l.b16 %v2502
    %v2867 = vunpack.c.h.b16 %v2502
    %v2868 = vunpack.c.l.b16 %v2503
    %v2869 = vunpack.c.h.b16 %v2503
    %v2870 = vunpack.c.l.b16 %v2504
    %v2871 = vunpack.c.h.b16 %v2504
    %v2872 = vunpack.c.l.b16 %v2505
    %v2873 = vunpack.c.h.b16 %v2505
    %v2874 = vunpack.c.l.b16 %v2506
    %v2875 = vunpack.c.h.b16 %v2506
    %v2876 = vunpack.c.l.b16 %v2507
    %v2877 = vunpack.c.h.b16 %v2507
    %v2878 = vunpack.c.l.b16 %v2508
    %v2879 = vunpack.c.h.b16 %v2508
    %v2880 = vunpack.c.l.b16 %v2509
    %v2881 = vunpack.c.h.b16 %v2509
    %v2882 = vunpack.c.l.b16 %v2510
    %v2883 = vunpack.c.h.b16 %v2510
    %v2884 = vunpack.c.l.b16 %v2511
    %v2885 = vunpack.c.h.b16 %v2511
    %v2886 = vunpack.c.l.b16 %v2512
    %v2887 = vunpack.c.h.b16 %v2512
    %v2888 = vunpack.c.l.b16 %v2513
    %v2889 = vunpack.c.h.b16 %v2513
    %v2890 = vunpack.c.l.b16 %v2514
    %v2891 = vunpack.c.h.b16 %v2514
    %v2892 = vunpack.c.l.b16 %v2515
    %v2893 = vunpack.c.h.b16 %v2515
    %v2894 = vunpack.c.l.b16 %v2516
    %v2895 = vunpack.c.h.b16 %v2516
    %v2896 = vunpack.c.l.b16 %v2517
    %v2897 = vunpack.c.h.b16 %v2517
    %v2898 = vunpack.c.l.b16 %v2518
    %v2899 = vunpack.c.h.b16 %v2518
    %v2900 = vunpack.c.l.b16 %v2519
    %v2901 = vunpack.c.h.b16 %v2519
    %v2902 = vunpack.c.l.b16 %v2520
    %v2903 = vunpack.c.h.b16 %v2520
    %v2904 = vunpack.c.l.b16 %v2521
    %v2905 = vunpack.c.h.b16 %v2521
    %v2906 = vunpack.c.l.b16 %v2522
    %v2907 = vunpack.c.h.b16 %v2522
    %v2908 = vunpack.c.l.b16 %v2523
    %v2909 = vunpack.c.h.b16 %v2523
    %v2910 = vunpack.c.l.b16 %v2524
    %v2911 = vunpack.c.h.b16 %v2524
    %v2912 = vunpack.c.l.b16 %v2525
    %v2913 = vunpack.c.h.b16 %v2525
    %v2914 = vunpack.c.l.b16 %v2526
    %v2915 = vunpack.c.h.b16 %v2526
    %v2916 = vunpack.c.l.b16 %v2527
    %v2917 = vunpack.c.h.b16 %v2527
    %v2918 = vpack.c.b16 %v2664, %v2662
    %v2919 = vpack.c.b16 %v2665, %v2663
    %v2920 = vpack.c.b16 %v2668, %v2666
    %v2921 = vpack.c.b16 %v2669, %v2667
    %v2922 = vpack.c.b16 %v2672, %v2670
    %v2923 = vpack.c.b16 %v2673, %v2671
    %v2924 = vpack.c.b16 %v2676, %v2674
    %v2925 = vpack.c.b16 %v2677, %v2675
    %v2926 = vpack.c.b16 %v2680, %v2678
    %v2927 = vpack.c.b16 %v2681, %v2679
    %v2928 = vpack.c.b16 %v2684, %v2682
    %v2929 = vpack.c.b16 %v2685, %v2683
    %v2930 = vpack.c.b16 %v2688, %v2686
    %v2931 = vpack.c.b16 %v2689, %v2687
    %v2932 = vpack.c.b16 %v2692, %v2690
    %v2933 = vpack.c.b16 %v2693, %v2691
    %v2934 = vpack.c.b16 %v2696, %v2694
    %v2935 = vpack.c.b16 %v2697, %v2695
    %v2936 = vpack.c.b16 %v2700, %v2698
    %v2937 = vpack.c.b16 %v2701, %v2699
    %v2938 = vpack.c.b16 %v2704, %v2702
    %v2939 = vpack.c.b16 %v2705, %v2703
    %v2940 = vpack.c.b16 %v2708, %v2706
    %v2941 = vpack.c.b16 %v2709, %v2707
    %v2942 = vpack.c.b16 %v2712, %v2710
    %v2943 = vpack.c.b16 %v2713, %v2711
    %v2944 = vpack.c.b16 %v2716, %v2714
    %v2945 = vpack.c.b16 %v2717, %v2715
    %v2946 = vpack.c.b16 %v2720, %v2718
    %v2947 = vpack.c.b16 %v2721, %v2719
    %v2948 = vpack.c.b16 %v2724, %v2722
    %v2949 = vpack.c.b16 %v2725, %v2723
    %v2950 = vpack.c.b16 %v2728, %v2726
    %v2951 = vpack.c.b16 %v2729, %v2727
    %v2952 = vpack.c.b16 %v2732, %v2730
    %v2953 = vpack.c.b16 %v2733, %v2731
    %v2954 = vpack.c.b16 %v2736, %v2734
    %v2955 = vpack.c.b16 %v2737, %v2735
    %v2956 = vpack.c.b16 %v2740, %v2738
    %v2957 = vpack.c.b16 %v2741, %v2739
    %v2958 = vpack.c.b16 %v2744, %v2742
    %v2959 = vpack.c.b16 %v2745, %v2743
    %v2960 = vpack.c.b16 %v2748, %v2746
    %v2961 = vpack.c.b16 %v2749, %v2747
    %v2962 = vpack.c.b16 %v2752, %v2750
    %v2963 = vpack.c.b16 %v2753, %v2751
    %v2964 = vpack.c.b16 %v2756, %v2754
    %v2965 = vpack.c.b16 %v2757, %v2755
    %v2966 = vpack.c.b16 %v2760, %v2758
    %v2967 = vpack.c.b16 %v2761, %v2759
    %v2968 = vpack.c.b16 %v2764, %v2762
    %v2969 = vpack.c.b16 %v2765, %v2763
    %v2970 = vpack.c.b16 %v2768, %v2766
    %v2971 = vpack.c.b16 %v2769, %v2767
    %v2972 = vpack.c.b16 %v2772, %v2770
    %v2973 = vpack.c.b16 %v2773, %v2771
    %v2974 = vpack.c.b16 %v2776, %v2774
    %v2975 = vpack.c.b16 %v2777, %v2775
    %v2976 = vpack.c.b16 %v2780, %v2778
    %v2977 = vpack.c.b16 %v2781, %v2779
    %v2978 = vpack.c.b16 %v2784, %v2782
    %v2979 = vpack.c.b16 %v2785, %v2783
    %v2980 = vpack.c.b16 %v2788, %v2786
    %v2981 = vpack.c.b16 %v2789, %v2787
    %v2982 = vpack.c.b16 %v2792, %v2790
    %v2983 = vpack.c.b16 %v2793, %v2791
    %v2984 = vpack.c.b16 %v2796, %v2794
    %v2985 = vpack.c.b16 %v2797, %v2795
    %v2986 = vpack.c.b16 %v2800, %v2798
    %v2987 = vpack.c.b16 %v2801, %v2799
    %v2988 = vpack.c.b16 %v2804, %v2802
    %v2989 = vpack.c.b16 %v2805, %v2803
    %v2990 = vpack.c.b16 %v2808, %v2806
    %v2991 = vpack.c.b16 %v2809, %v2807
    %v2992 = vpack.c.b16 %v2812, %v2810
    %v2993 = vpack.c.b16 %v2813, %v2811
    %v2994 = vpack.c.b16 %v2816, %v2814
    %v2995 = vpack.c.b16 %v2817, %v2815
    %v2996 = vpack.c.b16 %v2820, %v2818
    %v2997 = vpack.c.b16 %v2821, %v2819
    %v2998 = vpack.c.b16 %v2824, %v2822
    %v2999 = vpack.c.b16 %v2825, %v2823
    %v3000 = vpack.c.b16 %v2828, %v2826
    %v3001 = vpack.c.b16 %v2829, %v2827
    %v3002 = vpack.c.b16 %v2832, %v2830
    %v3003 = vpack.c.b16 %v2833, %v2831
    %v3004 = vpack.c.b16 %v2836, %v2834
    %v3005 = vpack.c.b16 %v2837, %v2835
    %v3006 = vpack.c.b16 %v2840, %v2838
    %v3007 = vpack.c.b16 %v2841, %v2839
    %v3008 = vpack.c.b16 %v2844, %v2842
    %v3009 = vpack.c.b16 %v2845, %v2843
    %v3010 = vpack.c.b16 %v2848, %v2846
    %v3011 = vpack.c.b16 %v2849, %v2847
    %v3012 = vpack.c.b16 %v2852, %v2850
    %v3013 = vpack.c.b16 %v2853, %v2851
    %v3014 = vpack.c.b16 %v2856, %v2854
    %v3015 = vpack.c.b16 %v2857, %v2855
    %v3016 = vpack.c.b16 %v2860, %v2858
    %v3017 = vpack.c.b16 %v2861, %v2859
    %v3018 = vpack.c.b16 %v2864, %v2862
    %v3019 = vpack.c.b16 %v2865, %v2863
    %v3020 = vpack.c.b16 %v2868, %v2866
    %v3021 = vpack.c.b16 %v2869, %v2867
    %v3022 = vpack.c.b16 %v2872, %v2870
    %v3023 = vpack.c.b16 %v2873, %v2871
    %v3024 = vpack.c.b16 %v2876, %v2874
    %v3025 = vpack.c.b16 %v2877, %v2875
    %v3026 = vpack.c.b16 %v2880, %v2878
    %v3027 = vpack.c.b16 %v2881, %v2879
    %v3028 = vpack.c.b16 %v2884, %v2882
    %v3029 = vpack.c.b16 %v2885, %v2883
    %v3030 = vpack.c.b16 %v2888, %v2886
    %v3031 = vpack.c.b16 %v2889, %v2887
    %v3032 = vpack.c.b16 %v2892, %v2890
    %v3033 = vpack.c.b16 %v2893, %v2891
    %v3034 = vpack.c.b16 %v2896, %v2894
    %v3035 = vpack.c.b16 %v2897, %v2895
    %v3036 = vpack.c.b16 %v2900, %v2898
    %v3037 = vpack.c.b16 %v2901, %v2899
    %v3038 = vpack.c.b16 %v2904, %v2902
    %v3039 = vpack.c.b16 %v2905, %v2903
    %v3040 = vpack.c.b16 %v2908, %v2906
    %v3041 = vpack.c.b16 %v2909, %v2907
    %v3042 = vpack.c.b16 %v2912, %v2910
    %v3043 = vpack.c.b16 %v2913, %v2911
    %v3044 = vpack.c.b16 %v2916, %v2914
    %v3045 = vpack.c.b16 %v2917, %v2915
    %3174 = vmatpush.bf16.msra.mxu0 %v2932
    %3175 = vmatpush.bf16.msra.mxu0 %v2930
    %3176 = vmatpush.bf16.msra.mxu0 %v2928
    %3177 = vmatpush.bf16.msra.mxu0 %v2926
    %3178 = vmatpush.bf16.msra.mxu0 %v2924
    %3179 = vmatpush.bf16.msra.mxu0 %v2922
    %3180 = vmatpush.bf16.msra.mxu0 %v2920
    %3181 = vmatpush.bf16.msra.mxu0 %v2918
    %3182 = vmatmul.bf16.gmra.mxu0 %v2392
    %v3183 = vpop.f32.mrf.mxu0
    %v3184 = vadd.f32 %v2530, %v3183
    %v3185 = vpop.f32.mrf.mxu0
    %3186 = vdwg.mxu0
    %3187 = vmatpush.bf16.msra.mxu0 %v2948
    %3188 = vmatpush.bf16.msra.mxu0 %v2946
    %3189 = vmatpush.bf16.msra.mxu0 %v2944
    %3190 = vmatpush.bf16.msra.mxu0 %v2942
    %3191 = vmatpush.bf16.msra.mxu0 %v2940
    %3192 = vmatpush.bf16.msra.mxu0 %v2938
    %3193 = vmatpush.bf16.msra.mxu0 %v2936
    %3194 = vmatpush.bf16.msra.mxu0 %v2934
    %3195 = vmatmul.bf16.gmra.mxu0 %v2393
    %v3196 = vpop.f32.mrf.mxu0
    %v3197 = vadd.f32 %v3184, %v3196
    %v3198 = vpop.f32.mrf.mxu0
    %3199 = vdwg.mxu0
    %3200 = vmatpush.bf16.msra.mxu0 %v2964
    %3201 = vmatpush.bf16.msra.mxu0 %v2962
    %3202 = vmatpush.bf16.msra.mxu0 %v2960
    %3203 = vmatpush.bf16.msra.mxu0 %v2958
    %3204 = vmatpush.bf16.msra.mxu0 %v2956
    %3205 = vmatpush.bf16.msra.mxu0 %v2954
    %3206 = vmatpush.bf16.msra.mxu0 %v2952
    %3207 = vmatpush.bf16.msra.mxu0 %v2950
    %3208 = vmatmul.bf16.gmra.mxu0 %v2394
    %v3209 = vpop.f32.mrf.mxu0
    %v3210 = vadd.f32 %v3197, %v3209
    %v3211 = vpop.f32.mrf.mxu0
    %3212 = vdwg.mxu0
    %3213 = vmatpush.bf16.msra.mxu0 %v2980
    %3214 = vmatpush.bf16.msra.mxu0 %v2978
    %3215 = vmatpush.bf16.msra.mxu0 %v2976
    %3216 = vmatpush.bf16.msra.mxu0 %v2974
    %3217 = vmatpush.bf16.msra.mxu0 %v2972
    %3218 = vmatpush.bf16.msra.mxu0 %v2970
    %3219 = vmatpush.bf16.msra.mxu0 %v2968
    %3220 = vmatpush.bf16.msra.mxu0 %v2966
    %3221 = vmatmul.bf16.gmra.mxu0 %v2395
    %v3222 = vpop.f32.mrf.mxu0
    %v3223 = vadd.f32 %v3210, %v3222
    %v3224 = vpop.f32.mrf.mxu0
    %3225 = vdwg.mxu0
    %3226 = vmatpush.bf16.msra.mxu0 %v2996
    %3227 = vmatpush.bf16.msra.mxu0 %v2994
    %3228 = vmatpush.bf16.msra.mxu0 %v2992
    %3229 = vmatpush.bf16.msra.mxu0 %v2990
    %3230 = vmatpush.bf16.msra.mxu0 %v2988
    %3231 = vmatpush.bf16.msra.mxu0 %v2986
    %3232 = vmatpush.bf16.msra.mxu0 %v2984
    %3233 = vmatpush.bf16.msra.mxu0 %v2982
    %3234 = vmatmul.bf16.gmra.mxu0 %v2396
    %v3235 = vpop.f32.mrf.mxu0
    %v3236 = vadd.f32 %v3223, %v3235
    %v3237 = vpop.f32.mrf.mxu0
    %3238 = vdwg.mxu0
    %3239 = vmatpush.bf16.msra.mxu0 %v3012
    %3240 = vmatpush.bf16.msra.mxu0 %v3010
    %3241 = vmatpush.bf16.msra.mxu0 %v3008
    %3242 = vmatpush.bf16.msra.mxu0 %v3006
    %3243 = vmatpush.bf16.msra.mxu0 %v3004
    %3244 = vmatpush.bf16.msra.mxu0 %v3002
    %3245 = vmatpush.bf16.msra.mxu0 %v3000
    %3246 = vmatpush.bf16.msra.mxu0 %v2998
    %3247 = vmatmul.bf16.gmra.mxu0 %v2397
    %v3248 = vpop.f32.mrf.mxu0
    %v3249 = vadd.f32 %v3236, %v3248
    %v3250 = vpop.f32.mrf.mxu0
    %3251 = vdwg.mxu0
    %3252 = vmatpush.bf16.msra.mxu0 %v3028
    %3253 = vmatpush.bf16.msra.mxu0 %v3026
    %3254 = vmatpush.bf16.msra.mxu0 %v3024
    %3255 = vmatpush.bf16.msra.mxu0 %v3022
    %3256 = vmatpush.bf16.msra.mxu0 %v3020
    %3257 = vmatpush.bf16.msra.mxu0 %v3018
    %3258 = vmatpush.bf16.msra.mxu0 %v3016
    %3259 = vmatpush.bf16.msra.mxu0 %v3014
    %3260 = vmatmul.bf16.gmra.mxu0 %v2398
    %v3261 = vpop.f32.mrf.mxu0
    %v3262 = vadd.f32 %v3249, %v3261
    %v3263 = vpop.f32.mrf.mxu0
    %3264 = vdwg.mxu0
    %3265 = vmatpush.bf16.msra.mxu0 %v3044
    %3266 = vmatpush.bf16.msra.mxu0 %v3042
    %3267 = vmatpush.bf16.msra.mxu0 %v3040
    %3268 = vmatpush.bf16.msra.mxu0 %v3038
    %3269 = vmatpush.bf16.msra.mxu0 %v3036
    %3270 = vmatpush.bf16.msra.mxu0 %v3034
    %3271 = vmatpush.bf16.msra.mxu0 %v3032
    %3272 = vmatpush.bf16.msra.mxu0 %v3030
    %3273 = vmatmul.bf16.gmra.mxu0 %v2399
    %v3274 = vpop.f32.mrf.mxu0
    %v3275 = vadd.f32 %v3262, %v3274
    %v3276 = vpop.f32.mrf.mxu0
    %3277 = vdwg.mxu0
    %3278 = vmatpush.bf16.msra.mxu0 %v2933
    %3279 = vmatpush.bf16.msra.mxu0 %v2931
    %3280 = vmatpush.bf16.msra.mxu0 %v2929
    %3281 = vmatpush.bf16.msra.mxu0 %v2927
    %3282 = vmatpush.bf16.msra.mxu0 %v2925
    %3283 = vmatpush.bf16.msra.mxu0 %v2923
    %3284 = vmatpush.bf16.msra.mxu0 %v2921
    %3285 = vmatpush.bf16.msra.mxu0 %v2919
    %3286 = vmatmul.bf16.gmra.mxu0 %v2392
    %v3287 = vpop.f32.mrf.mxu0
    %v3288 = vadd.f32 %v2531, %v3287
    %v3289 = vpop.f32.mrf.mxu0
    %3290 = vdwg.mxu0
    %3291 = vmatpush.bf16.msra.mxu0 %v2949
    %3292 = vmatpush.bf16.msra.mxu0 %v2947
    %3293 = vmatpush.bf16.msra.mxu0 %v2945
    %3294 = vmatpush.bf16.msra.mxu0 %v2943
    %3295 = vmatpush.bf16.msra.mxu0 %v2941
    %3296 = vmatpush.bf16.msra.mxu0 %v2939
    %3297 = vmatpush.bf16.msra.mxu0 %v2937
    %3298 = vmatpush.bf16.msra.mxu0 %v2935
    %3299 = vmatmul.bf16.gmra.mxu0 %v2393
    %v3300 = vpop.f32.mrf.mxu0
    %v3301 = vadd.f32 %v3288, %v3300
    %v3302 = vpop.f32.mrf.mxu0
    %3303 = vdwg.mxu0
    %3304 = vmatpush.bf16.msra.mxu0 %v2965
    %3305 = vmatpush.bf16.msra.mxu0 %v2963
    %3306 = vmatpush.bf16.msra.mxu0 %v2961
    %3307 = vmatpush.bf16.msra.mxu0 %v2959
    %3308 = vmatpush.bf16.msra.mxu0 %v2957
    %3309 = vmatpush.bf16.msra.mxu0 %v2955
    %3310 = vmatpush.bf16.msra.mxu0 %v2953
    %3311 = vmatpush.bf16.msra.mxu0 %v2951
    %3312 = vmatmul.bf16.gmra.mxu0 %v2394
    %v3313 = vpop.f32.mrf.mxu0
    %v3314 = vadd.f32 %v3301, %v3313
    %v3315 = vpop.f32.mrf.mxu0
    %3316 = vdwg.mxu0
    %3317 = vmatpush.bf16.msra.mxu0 %v2981
    %3318 = vmatpush.bf16.msra.mxu0 %v2979
    %3319 = vmatpush.bf16.msra.mxu0 %v2977
    %3320 = vmatpush.bf16.msra.mxu0 %v2975
    %3321 = vmatpush.bf16.msra.mxu0 %v2973
    %3322 = vmatpush.bf16.msra.mxu0 %v2971
    %3323 = vmatpush.bf16.msra.mxu0 %v2969
    %3324 = vmatpush.bf16.msra.mxu0 %v2967
    %3325 = vmatmul.bf16.gmra.mxu0 %v2395
    %v3326 = vpop.f32.mrf.mxu0
    %v3327 = vadd.f32 %v3314, %v3326
    %v3328 = vpop.f32.mrf.mxu0
    %3329 = vdwg.mxu0
    %3330 = vmatpush.bf16.msra.mxu0 %v2997
    %3331 = vmatpush.bf16.msra.mxu0 %v2995
    %3332 = vmatpush.bf16.msra.mxu0 %v2993
    %3333 = vmatpush.bf16.msra.mxu0 %v2991
    %3334 = vmatpush.bf16.msra.mxu0 %v2989
    %3335 = vmatpush.bf16.msra.mxu0 %v2987
    %3336 = vmatpush.bf16.msra.mxu0 %v2985
    %3337 = vmatpush.bf16.msra.mxu0 %v2983
    %3338 = vmatmul.bf16.gmra.mxu0 %v2396
    %v3339 = vpop.f32.mrf.mxu0
    %v3340 = vadd.f32 %v3327, %v3339
    %v3341 = vpop.f32.mrf.mxu0
    %3342 = vdwg.mxu0
    %3343 = vmatpush.bf16.msra.mxu0 %v3013
    %3344 = vmatpush.bf16.msra.mxu0 %v3011
    %3345 = vmatpush.bf16.msra.mxu0 %v3009
    %3346 = vmatpush.bf16.msra.mxu0 %v3007
    %3347 = vmatpush.bf16.msra.mxu0 %v3005
    %3348 = vmatpush.bf16.msra.mxu0 %v3003
    %3349 = vmatpush.bf16.msra.mxu0 %v3001
    %3350 = vmatpush.bf16.msra.mxu0 %v2999
    %3351 = vmatmul.bf16.gmra.mxu0 %v2397
    %v3352 = vpop.f32.mrf.mxu0
    %v3353 = vadd.f32 %v3340, %v3352
    %v3354 = vpop.f32.mrf.mxu0
    %3355 = vdwg.mxu0
    %3356 = vmatpush.bf16.msra.mxu0 %v3029
    %3357 = vmatpush.bf16.msra.mxu0 %v3027
    %3358 = vmatpush.bf16.msra.mxu0 %v3025
    %3359 = vmatpush.bf16.msra.mxu0 %v3023
    %3360 = vmatpush.bf16.msra.mxu0 %v3021
    %3361 = vmatpush.bf16.msra.mxu0 %v3019
    %3362 = vmatpush.bf16.msra.mxu0 %v3017
    %3363 = vmatpush.bf16.msra.mxu0 %v3015
    %3364 = vmatmul.bf16.gmra.mxu0 %v2398
    %v3365 = vpop.f32.mrf.mxu0
    %v3366 = vadd.f32 %v3353, %v3365
    %v3367 = vpop.f32.mrf.mxu0
    %3368 = vdwg.mxu0
    %3369 = vmatpush.bf16.msra.mxu0 %v3045
    %3370 = vmatpush.bf16.msra.mxu0 %v3043
    %3371 = vmatpush.bf16.msra.mxu0 %v3041
    %3372 = vmatpush.bf16.msra.mxu0 %v3039
    %3373 = vmatpush.bf16.msra.mxu0 %v3037
    %3374 = vmatpush.bf16.msra.mxu0 %v3035
    %3375 = vmatpush.bf16.msra.mxu0 %v3033
    %3376 = vmatpush.bf16.msra.mxu0 %v3031
    %3377 = vmatmul.bf16.gmra.mxu0 %v2399
    %v3378 = vpop.f32.mrf.mxu0
    %v3379 = vadd.f32 %v3366, %v3378
    %v3380 = vpop.f32.mrf.mxu0
    %3381 = vdwg.mxu0
    %v3384 = vrot.slane %v3379, 6
    %vm3385 = vcmask 1041408
    %v3386 = vsel %vm3385, %v3275, %v3384
    %vm3388 = vcmask 519170
    %vm3389 = vmor %vm3388, %vm3385
    %3390 = vst.msk [vmem:[#allocation5] sm:$0xf] %vm3389, %v3386
    // Predicated region
    $region50: #{tpu_custom_call.1} parent=1 // pred_check
      _
    $region51: #{tpu_custom_call.1} parent=1 // pred_check_branch
      %3392 = sbr.rel (0) target = $region53
    $region52: #{tpu_custom_call.1} parent=1 // pred_region
      %3394 = vsyncadd [#allocation4], 0
      %s3396 = sshll.u32 [#allocation5], 4
      %s3397 = int_to_ptr.vmem [resolvable:$true] %s3396
      %s3398 = sshll.u32 %s11, 4
      %s3399 = int_to_ptr.hbm [resolvable:$true] %s3398
      %3401 = dma.vmem_to_hbm [thread:$0]  %s3397, 64, %s3399, [#allocation4]
    $region53: #{tpu_custom_call.1} parent=1 // pred_fallthru
      _
    // Predicated region
    $region54: #{tpu_custom_call.1} parent=1 // pred_check
      _
    $region55: #{tpu_custom_call.1} parent=1 // pred_check_branch
      %3403 = sbr.rel (0) target = $region57
    $region56: #{tpu_custom_call.1} parent=1 // pred_region
      %3405 = dma.done [#allocation4], 64
    $region57: #{tpu_custom_call.1} parent=1 // pred_fallthru
      _
    %3406 = vsyncpa [#allocation3], 1
    %3407 = vsyncpa [#allocation4], 1

</llo_original>
